<compile_context>
chip_gen: v5e
topology: v5e:2x2
jax: 0.10.0
libtpu: 0.0.40
codegen_flags: <defaults>
</compile_context>

<pallas_src>
import functools

import jax
import jax.numpy as jnp
import numpy as np
from jax import lax
from jax.experimental import pallas as pl
from jax.experimental.pallas import tpu as pltpu

N_DMA_SLOTS = 8  # outstanding row copies in the gather path


# ----------------------------------------------------------------------------
# Path B: HBM DMA row gather (table stays in HBM, ids scalar-prefetched).
# ----------------------------------------------------------------------------
def _gather_kernel(idx_ref, w_hbm, out_ref, copy_sems):
    # idx_ref   : SMEM (N_pad,) int32    -- all flat token ids (scalar prefetch)
    # w_hbm     : HBM  (V, D)            -- full embedding table, never in VMEM
    # out_ref   : VMEM (T, D)            -- gathered rows for this token block
    # copy_sems : DMA semaphores (N_DMA_SLOTS,)
    T, _ = out_ref.shape
    V = w_hbm.shape[0]
    base = pl.program_id(0) * T

    def start_row(t):
        row = idx_ref[base + t]
        row = jnp.minimum(jnp.maximum(row, 0), V - 1)  # never DMA out of bounds
        pltpu.make_async_copy(
            w_hbm.at[row], out_ref.at[t], copy_sems.at[t % N_DMA_SLOTS]
        ).start()

    def wait_row(t):
        # Source slice is irrelevant for wait(); only shape/bytes + sem matter.
        pltpu.make_async_copy(
            w_hbm.at[0], out_ref.at[t], copy_sems.at[t % N_DMA_SLOTS]
        ).wait()

    # Prime up to N_DMA_SLOTS outstanding copies, then slide the window.
    @pl.loop(0, min(N_DMA_SLOTS, T))
    def _(t):
        start_row(t)

    @pl.loop(0, T)
    def _(t):
        wait_row(t)

        @pl.when(t + N_DMA_SLOTS < T)
        def _():
            start_row(t + N_DMA_SLOTS)


def _gather_call(flat_idx, weight, n_pad, num_blocks, tokens_per_block):
    V, D = weight.shape
    itemsize = jnp.dtype(weight.dtype).itemsize

    grid_spec = pltpu.PrefetchScalarGridSpec(
        num_scalar_prefetch=1,
        grid=(num_blocks,),
        in_specs=[pl.BlockSpec(memory_space=pl.ANY)],  # table stays in HBM
        out_specs=pl.BlockSpec((tokens_per_block, D), lambda i, idx: (i, 0)),
        scratch_shapes=[pltpu.SemaphoreType.DMA((N_DMA_SLOTS,))],
    )
    cost = pl.CostEstimate(
        flops=0,
        transcendentals=0,
        bytes_accessed=2 * n_pad * D * itemsize + n_pad * 4,
    )
    return pl.pallas_call(
        _gather_kernel,
        out_shape=jax.ShapeDtypeStruct((n_pad, D), weight.dtype),
        grid_spec=grid_spec,
        compiler_params=pltpu.CompilerParams(dimension_semantics=("parallel",)),
        cost_estimate=cost,
    )(flat_idx, weight)


# ----------------------------------------------------------------------------
# Path A: one-hot MXU gather (tiny vocab only; table resident in VMEM once).
# ----------------------------------------------------------------------------
def _onehot_kernel(idx_ref, w_ref, out_ref):
    # idx_ref : VMEM (T, 1) int32   -- token ids for this block (pre-clamped)
    # w_ref   : VMEM (Vp, D)        -- full padded table (untiled, 1 buffer)
    # out_ref : VMEM (T, D)
    T = out_ref.shape[0]
    Vp = w_ref.shape[0]

    idx = idx_ref[...]                                            # (T, 1)
    vocab_iota = lax.broadcasted_iota(jnp.int32, (T, Vp), 1)      # (T, Vp)
    one_hot = (idx == vocab_iota).astype(w_ref.dtype)             # (T, Vp)

    # Exact-row-copy precision only where it is needed: f32 tables need the
    # multi-pass decomposition; bf16 0/1 gather is exact at default precision.
    precision = lax.Precision.HIGHEST if w_ref.dtype == jnp.float32 else None
    gathered = jnp.dot(
        one_hot,
        w_ref[...],
        preferred_element_type=jnp.float32,
        precision=precision,
    )
    out_ref[...] = gathered.astype(out_ref.dtype)


def _onehot_call(flat_idx, weight, vocab_padded, n_pad, num_blocks,
                 tokens_per_block, est_vmem_bytes):
    V, D = weight.shape
    itemsize = jnp.dtype(weight.dtype).itemsize
    if vocab_padded != V:
        # Padded rows are never selected (ids are clamped to [0, V-1]).
        weight = jnp.pad(weight, ((0, vocab_padded - V), (0, 0)))
    idx2d = flat_idx.reshape(n_pad, 1)

    # Never set the scoped-VMEM limit below the v6e/v7x 32 MiB default.
    vmem_limit = None
    if est_vmem_bytes + (2 << 20) > (16 << 20):
        vmem_limit = max(32 << 20, est_vmem_bytes + (4 << 20))

    cost = pl.CostEstimate(
        flops=2 * n_pad * vocab_padded * D,
        transcendentals=0,
        bytes_accessed=vocab_padded * D * itemsize
        + 2 * n_pad * D * itemsize
        + n_pad * 4,
    )
    return pl.pallas_call(
        _onehot_kernel,
        out_shape=jax.ShapeDtypeStruct((n_pad, D), weight.dtype),
        grid=(num_blocks,),
        in_specs=[
            pl.BlockSpec((tokens_per_block, 1), lambda i: (i, 0)),
            # Whole table placed in VMEM once (no per-step re-DMA, no 2x buffer).
            pl.BlockSpec(memory_space=pltpu.MemorySpace.VMEM),
        ],
        out_specs=pl.BlockSpec((tokens_per_block, D), lambda i: (i, 0)),
        compiler_params=pltpu.CompilerParams(
            dimension_semantics=("parallel",),
            vmem_limit_bytes=vmem_limit,
        ),
        cost_estimate=cost,
    )(idx2d, weight)


# ----------------------------------------------------------------------------
# Wrapper (nn.Embedding.forward semantics: out = weight[x], any index shape).
# ----------------------------------------------------------------------------
def _vmem_capacity_bytes():
    try:
        return int(pltpu.get_tpu_info().vmem_capacity_bytes)
    except Exception:
        return 64 << 20  # conservative (v7x per-TC)


def embedding_forward(indices, weight, *, tokens_per_block=None, use_gather=None):
    """indices: int array (...); weight: (V, D). Returns (..., D) in weight.dtype."""
    orig_shape = indices.shape
    V, D = weight.shape
    w_itemsize = jnp.dtype(weight.dtype).itemsize

    # Clamp once (nn.Embedding errors on OOB; we clamp rather than read OOB).
    flat_idx = jnp.clip(indices.reshape(-1).astype(jnp.int32), 0, V - 1)
    N = flat_idx.shape[0]

    vmem_cap = _vmem_capacity_bytes()
    if tokens_per_block is None:
        # 512 on 128 MiB-VMEM chips (v5e/v6e), 256 on 64 MiB (v7x).
        tokens_per_block = 512 if vmem_cap >= (96 << 20) else 256

    num_blocks = pl.cdiv(N, tokens_per_block)
    n_pad = num_blocks * tokens_per_block
    if n_pad != N:
        flat_idx = jnp.pad(flat_idx, (0, n_pad - N))  # padded rows sliced off

    # One-hot path footprint (single-buffered table + double-buffered out
    # blocks + idx blocks + one-hot temp + f32 accumulator + HIGHEST splits).
    vocab_padded = ((V + 127) // 128) * 128
    est_onehot = (
        vocab_padded * D * w_itemsize
        + 2 * tokens_per_block * D * w_itemsize
        + 2 * tokens_per_block * 4
        + tokens_per_block * vocab_padded * w_itemsize
        + tokens_per_block * D * 4
    )
    if weight.dtype == jnp.float32:
        est_onehot += tokens_per_block * vocab_padded * 4

    if use_gather is None:
        budget = min(48 << 20, vmem_cap // 2)
        use_gather = (vocab_padded > 2048) or (est_onehot + (4 << 20) > budget)

    if use_gather:
        out = _gather_call(flat_idx, weight, n_pad, num_blocks, tokens_per_block)
    else:
        out = _onehot_call(flat_idx, weight, vocab_padded, n_pad, num_blocks,
                           tokens_per_block, est_onehot)

    return out[:N].reshape(*orig_shape, D)


if __name__ == "__main__":
    key = jax.random.PRNGKey(0)
    k_w, k_x, k_w2, k_x2, k_w3, k_x3 = jax.random.split(key, 6)

    # --- case 1: module's toy shapes (small vocab -> one-hot MXU path) ------
    vocab_size, embed_dim = 32, 128
    batch, seq = 2, 8
    weight_matrix = jax.random.normal(k_w, (vocab_size, embed_dim), dtype=jnp.float32)
    x = jax.random.randint(k_x, (batch, seq), 0, vocab_size, dtype=jnp.int32)

    y = jax.block_until_ready(embedding_forward(x, weight_matrix))
    y_ref = jnp.take(weight_matrix, x.reshape(-1), axis=0).reshape(batch, seq, embed_dim)
    np.testing.assert_allclose(np.asarray(y), np.asarray(y_ref), rtol=1e-6, atol=1e-6)

    # --- case 1b: same inputs through the DMA-gather path (exact copy) ------
    y_g = jax.block_until_ready(embedding_forward(x, weight_matrix, use_gather=True))
    np.testing.assert_array_equal(np.asarray(y_g), np.asarray(y_ref))

    # --- case 2: irregular N (padding) + non-128 vocab -----------------------
    vocab2, dim2 = 50, 256
    b2, s2 = 3, 100
    weight2 = jax.random.normal(k_w2, (vocab2, dim2), dtype=jnp.float32)
    x2 = jax.random.randint(k_x2, (b2, s2), 0, vocab2, dtype=jnp.int32)

    y2 = jax.block_until_ready(embedding_forward(x2, weight2))
    y2_ref = jnp.take(weight2, x2.reshape(-1), axis=0).reshape(b2, s2, dim2)
    np.testing.assert_allclose(np.asarray(y2), np.asarray(y2_ref), rtol=1e-6, atol=1e-6)

    # --- case 3: larger vocab -> auto-selects the HBM DMA row-gather path ----
    vocab3, dim3 = 4096, 128
    b3, s3 = 2, 64
    weight3 = jax.random.normal(k_w3, (vocab3, dim3), dtype=jnp.float32)
    x3 = jax.random.randint(k_x3, (b3, s3), 0, vocab3, dtype=jnp.int32)

    y3 = jax.block_until_ready(embedding_forward(x3, weight3))
    y3_ref = jnp.take(weight3, x3.reshape(-1), axis=0).reshape(b3, s3, dim3)
    np.testing.assert_array_equal(np.asarray(y3), np.asarray(y3_ref))

    print("KERNEL_OK")
</pallas_src>

<mosaic_0001>
module attributes {stable_mosaic.version = 11 : i64} {
  func.func @_onehot_kernel(%arg0: i32, %arg1: memref<256x1xi32, #tpu.memory_space<vmem>>, %arg2: memref<128x128xf32, #tpu.memory_space<vmem>>, %arg3: memref<256x128xf32, #tpu.memory_space<vmem>>) attributes {dimension_semantics = [#tpu.dimension_semantics<parallel>], iteration_bounds = array<i64: 1>, scalar_prefetch = 0 : i64, scratch_operands = 0 : i64, tpu.core_type = #tpu.core_type<tc>, window_params = [{transform_indices = @transform_0, window_bounds = array<i64: 256, 1>}, {pipeline_mode = #tpu.pipeline_mode<synchronous>, transform_indices = @transform_1, window_bounds = array<i64: 128, 128>}, {transform_indices = @transform_2, window_bounds = array<i64: 256, 128>}]} {
    %c0 = arith.constant 0 : index
    %c0_0 = arith.constant 0 : index
    %0 = vector.load %arg1[%c0, %c0_0] : memref<256x1xi32, #tpu.memory_space<vmem>>, vector<256x1xi32>
    %1 = tpu.iota {dimensions = array<i32: 1>} : vector<256x128xi32>
    %2 = vector.broadcast %0 : vector<256x1xi32> to vector<256x128xi32>
    %3 = arith.cmpi eq, %2, %1 : vector<256x128xi32>
    %4 = arith.extui %3 : vector<256x128xi1> to vector<256x128xi32>
    %5 = arith.sitofp %4 : vector<256x128xi32> to vector<256x128xf32>
    %c0_1 = arith.constant 0 : index
    %c0_2 = arith.constant 0 : index
    %6 = vector.load %arg2[%c0_1, %c0_2] : memref<128x128xf32, #tpu.memory_space<vmem>>, vector<128x128xf32>
    %cst = arith.constant dense<0.000000e+00> : vector<256x128xf32>
    %7 = tpu.matmul %5, %6, %cst {dimension_numbers = #tpu.dot_dimension_numbers<[1], [0], [0], [1], [0, 0, 1, 1], [], []>, precision = #tpu.contract_precision<fp32>} : vector<256x128xf32>, vector<128x128xf32>, vector<256x128xf32> -> vector<256x128xf32>
    %c0_3 = arith.constant 0 : index
    %c0_4 = arith.constant 0 : index
    %8 = vector.load %arg3[%c0_3, %c0_4] : memref<256x128xf32, #tpu.memory_space<vmem>>, vector<256x128xf32>
    tpu.vector_store %arg3[%c0_3, %c0_4], %7 {strides = array<i32>} : memref<256x128xf32, #tpu.memory_space<vmem>>, vector<256x128xf32>,
    return
  }
  func.func @transform_0(%arg0: i32) -> (i32, i32) {
    %c0_i32 = arith.constant 0 : i32
    %c0_i32_0 = arith.constant 0 : i32
    return %arg0, %c0_i32 : i32, i32
  }
  func.func @transform_1(%arg0: i32) -> (i32, i32) {
    %c0_i32 = arith.constant 0 : i32
    %c0_i32_0 = arith.constant 0 : i32
    %c0_i32_1 = arith.constant 0 : i32
    return %c0_i32, %c0_i32_0 : i32, i32
  }
  func.func @transform_2(%arg0: i32) -> (i32, i32) {
    %c0_i32 = arith.constant 0 : i32
    %c0_i32_0 = arith.constant 0 : i32
    return %arg0, %c0_i32 : i32, i32
  }
}

</mosaic_0001>

<llo_original>
// kernel: tpu_custom_call.1
$region0: #{tpu_custom_call.1}
  #allocation0 [shape = 'u32[]', space=smem, size = 0x4, offset = 0x4, fixed_abs, tag = 'smem constant byte address 0x4 - core index']
  #allocation1 [shape = 'u32[72,128]{1,0:T(1,128)}', space=vmem, size = 0x9000, scoped, tag = 'internal scratch']
  %s0 = inlined_call_operand.vmem [shape: s32[256,1], index: 0, kind: input, shape index: {}]
  %s1 = inlined_call_operand.vmem [shape: f32[128,128], index: 1, kind: input, shape index: {}]
  %s2 = inlined_call_operand.hbm [shape: f32[256,128], index: 2, kind: output, shape index: {}]
  %s3 = sld [smem:[#allocation0]]
  $region18: #{tpu_custom_call.1} parent=0
    _
  %s5 = ssub.s32 1, %s3
  %s6 = scalar_select 0, %s5, %s3
  $region1: #{tpu_custom_call.1} parent=0
    #allocation2 [shape = 'u8[131072]{0}', space=vmem, size = 0x20000, scoped, tag = 'output window, operand 0, single buffered']
    #allocation3 [shape = 's32[1]{0}', space=sflag, size = 0x4, scoped, tag = 'scoped memory for tpu_custom_call.1']
    %7 = vsyncpa [#allocation3], 0
    // Predicated region
    $region2: #{tpu_custom_call.1} parent=1 // pred_check
      _
    $region3: #{tpu_custom_call.1} parent=1 // pred_check_branch
      %9 = sbr.rel (0) target = $region5
    $region4: #{tpu_custom_call.1} parent=1 // pred_region
      _
    $region5: #{tpu_custom_call.1} parent=1 // pred_fallthru
      _
    // Predicated region
    $region6: #{tpu_custom_call.1} parent=1 // pred_check
      _
    $region7: #{tpu_custom_call.1} parent=1 // pred_check_branch
      %11 = sbr.rel (0) target = $region9
    $region8: #{tpu_custom_call.1} parent=1 // pred_region
      _
    $region9: #{tpu_custom_call.1} parent=1 // pred_fallthru
      _
    %v12 = vld [vmem:[%s0] sm:$0xff]
    %v13 = vld [vmem:[%s0 + $0x8] sm:$0xff]
    %v14 = vld [vmem:[%s0 + $0x10] sm:$0xff]
    %v15 = vld [vmem:[%s0 + $0x18] sm:$0xff]
    %v16 = vld [vmem:[%s0 + $0x20] sm:$0xff]
    %v17 = vld [vmem:[%s0 + $0x28] sm:$0xff]
    %v18 = vld [vmem:[%s0 + $0x30] sm:$0xff]
    %v19 = vld [vmem:[%s0 + $0x38] sm:$0xff]
    %v20 = vld [vmem:[%s0 + $0x40] sm:$0xff]
    %v21 = vld [vmem:[%s0 + $0x48] sm:$0xff]
    %v22 = vld [vmem:[%s0 + $0x50] sm:$0xff]
    %v23 = vld [vmem:[%s0 + $0x58] sm:$0xff]
    %v24 = vld [vmem:[%s0 + $0x60] sm:$0xff]
    %v25 = vld [vmem:[%s0 + $0x68] sm:$0xff]
    %v26 = vld [vmem:[%s0 + $0x70] sm:$0xff]
    %v27 = vld [vmem:[%s0 + $0x78] sm:$0xff]
    %v28 = vld [vmem:[%s0 + $0x80] sm:$0xff]
    %v29 = vld [vmem:[%s0 + $0x88] sm:$0xff]
    %v30 = vld [vmem:[%s0 + $0x90] sm:$0xff]
    %v31 = vld [vmem:[%s0 + $0x98] sm:$0xff]
    %v32 = vld [vmem:[%s0 + $0xa0] sm:$0xff]
    %v33 = vld [vmem:[%s0 + $0xa8] sm:$0xff]
    %v34 = vld [vmem:[%s0 + $0xb0] sm:$0xff]
    %v35 = vld [vmem:[%s0 + $0xb8] sm:$0xff]
    %v36 = vld [vmem:[%s0 + $0xc0] sm:$0xff]
    %v37 = vld [vmem:[%s0 + $0xc8] sm:$0xff]
    %v38 = vld [vmem:[%s0 + $0xd0] sm:$0xff]
    %v39 = vld [vmem:[%s0 + $0xd8] sm:$0xff]
    %v40 = vld [vmem:[%s0 + $0xe0] sm:$0xff]
    %v41 = vld [vmem:[%s0 + $0xe8] sm:$0xff]
    %v42 = vld [vmem:[%s0 + $0xf0] sm:$0xff]
    %v43 = vld [vmem:[%s0 + $0xf8] sm:$0xff]
    %v44 = vlaneseq
    %v45 = vand.u32 %v44, 127
    %46 = vset.pattern.permute.xlu0 0
    %47 = vperm.xlu0 %46, %v12
    %v48 = vpop.permute.xlu0 %47
    %49 = vset.pattern.permute.xlu0 0
    %50 = vperm.xlu0 %49, %v13
    %v51 = vpop.permute.xlu0 %50
    %52 = vset.pattern.permute.xlu0 0
    %53 = vperm.xlu0 %52, %v14
    %v54 = vpop.permute.xlu0 %53
    %55 = vset.pattern.permute.xlu0 0
    %56 = vperm.xlu0 %55, %v15
    %v57 = vpop.permute.xlu0 %56
    %58 = vset.pattern.permute.xlu0 0
    %59 = vperm.xlu0 %58, %v16
    %v60 = vpop.permute.xlu0 %59
    %61 = vset.pattern.permute.xlu0 0
    %62 = vperm.xlu0 %61, %v17
    %v63 = vpop.permute.xlu0 %62
    %64 = vset.pattern.permute.xlu0 0
    %65 = vperm.xlu0 %64, %v18
    %v66 = vpop.permute.xlu0 %65
    %67 = vset.pattern.permute.xlu0 0
    %68 = vperm.xlu0 %67, %v19
    %v69 = vpop.permute.xlu0 %68
    %70 = vset.pattern.permute.xlu0 0
    %71 = vperm.xlu0 %70, %v20
    %v72 = vpop.permute.xlu0 %71
    %73 = vset.pattern.permute.xlu0 0
    %74 = vperm.xlu0 %73, %v21
    %v75 = vpop.permute.xlu0 %74
    %76 = vset.pattern.permute.xlu0 0
    %77 = vperm.xlu0 %76, %v22
    %v78 = vpop.permute.xlu0 %77
    %79 = vset.pattern.permute.xlu0 0
    %80 = vperm.xlu0 %79, %v23
    %v81 = vpop.permute.xlu0 %80
    %82 = vset.pattern.permute.xlu0 0
    %83 = vperm.xlu0 %82, %v24
    %v84 = vpop.permute.xlu0 %83
    %85 = vset.pattern.permute.xlu0 0
    %86 = vperm.xlu0 %85, %v25
    %v87 = vpop.permute.xlu0 %86
    %88 = vset.pattern.permute.xlu0 0
    %89 = vperm.xlu0 %88, %v26
    %v90 = vpop.permute.xlu0 %89
    %91 = vset.pattern.permute.xlu0 0
    %92 = vperm.xlu0 %91, %v27
    %v93 = vpop.permute.xlu0 %92
    %94 = vset.pattern.permute.xlu0 0
    %95 = vperm.xlu0 %94, %v28
    %v96 = vpop.permute.xlu0 %95
    %97 = vset.pattern.permute.xlu0 0
    %98 = vperm.xlu0 %97, %v29
    %v99 = vpop.permute.xlu0 %98
    %100 = vset.pattern.permute.xlu0 0
    %101 = vperm.xlu0 %100, %v30
    %v102 = vpop.permute.xlu0 %101
    %103 = vset.pattern.permute.xlu0 0
    %104 = vperm.xlu0 %103, %v31
    %v105 = vpop.permute.xlu0 %104
    %106 = vset.pattern.permute.xlu0 0
    %107 = vperm.xlu0 %106, %v32
    %v108 = vpop.permute.xlu0 %107
    %109 = vset.pattern.permute.xlu0 0
    %110 = vperm.xlu0 %109, %v33
    %v111 = vpop.permute.xlu0 %110
    %112 = vset.pattern.permute.xlu0 0
    %113 = vperm.xlu0 %112, %v34
    %v114 = vpop.permute.xlu0 %113
    %115 = vset.pattern.permute.xlu0 0
    %116 = vperm.xlu0 %115, %v35
    %v117 = vpop.permute.xlu0 %116
    %118 = vset.pattern.permute.xlu0 0
    %119 = vperm.xlu0 %118, %v36
    %v120 = vpop.permute.xlu0 %119
    %121 = vset.pattern.permute.xlu0 0
    %122 = vperm.xlu0 %121, %v37
    %v123 = vpop.permute.xlu0 %122
    %124 = vset.pattern.permute.xlu0 0
    %125 = vperm.xlu0 %124, %v38
    %v126 = vpop.permute.xlu0 %125
    %127 = vset.pattern.permute.xlu0 0
    %128 = vperm.xlu0 %127, %v39
    %v129 = vpop.permute.xlu0 %128
    %130 = vset.pattern.permute.xlu0 0
    %131 = vperm.xlu0 %130, %v40
    %v132 = vpop.permute.xlu0 %131
    %133 = vset.pattern.permute.xlu0 0
    %134 = vperm.xlu0 %133, %v41
    %v135 = vpop.permute.xlu0 %134
    %136 = vset.pattern.permute.xlu0 0
    %137 = vperm.xlu0 %136, %v42
    %v138 = vpop.permute.xlu0 %137
    %139 = vset.pattern.permute.xlu0 0
    %140 = vperm.xlu0 %139, %v43
    %v141 = vpop.permute.xlu0 %140
    %vm142 = vcmp.eq.s32.totalorder %v48, %v45
    %vm143 = vcmp.eq.s32.totalorder %v51, %v45
    %vm144 = vcmp.eq.s32.totalorder %v54, %v45
    %vm145 = vcmp.eq.s32.totalorder %v57, %v45
    %vm146 = vcmp.eq.s32.totalorder %v60, %v45
    %vm147 = vcmp.eq.s32.totalorder %v63, %v45
    %vm148 = vcmp.eq.s32.totalorder %v66, %v45
    %vm149 = vcmp.eq.s32.totalorder %v69, %v45
    %vm150 = vcmp.eq.s32.totalorder %v72, %v45
    %vm151 = vcmp.eq.s32.totalorder %v75, %v45
    %vm152 = vcmp.eq.s32.totalorder %v78, %v45
    %vm153 = vcmp.eq.s32.totalorder %v81, %v45
    %vm154 = vcmp.eq.s32.totalorder %v84, %v45
    %vm155 = vcmp.eq.s32.totalorder %v87, %v45
    %vm156 = vcmp.eq.s32.totalorder %v90, %v45
    %vm157 = vcmp.eq.s32.totalorder %v93, %v45
    %vm158 = vcmp.eq.s32.totalorder %v96, %v45
    %vm159 = vcmp.eq.s32.totalorder %v99, %v45
    %vm160 = vcmp.eq.s32.totalorder %v102, %v45
    %vm161 = vcmp.eq.s32.totalorder %v105, %v45
    %vm162 = vcmp.eq.s32.totalorder %v108, %v45
    %vm163 = vcmp.eq.s32.totalorder %v111, %v45
    %vm164 = vcmp.eq.s32.totalorder %v114, %v45
    %vm165 = vcmp.eq.s32.totalorder %v117, %v45
    %vm166 = vcmp.eq.s32.totalorder %v120, %v45
    %vm167 = vcmp.eq.s32.totalorder %v123, %v45
    %vm168 = vcmp.eq.s32.totalorder %v126, %v45
    %vm169 = vcmp.eq.s32.totalorder %v129, %v45
    %vm170 = vcmp.eq.s32.totalorder %v132, %v45
    %vm171 = vcmp.eq.s32.totalorder %v135, %v45
    %vm172 = vcmp.eq.s32.totalorder %v138, %v45
    %vm173 = vcmp.eq.s32.totalorder %v141, %v45
    %v174 = vsel %vm142, 1, 0
    %v175 = vsel %vm143, 1, 0
    %v176 = vsel %vm144, 1, 0
    %v177 = vsel %vm145, 1, 0
    %v178 = vsel %vm146, 1, 0
    %v179 = vsel %vm147, 1, 0
    %v180 = vsel %vm148, 1, 0
    %v181 = vsel %vm149, 1, 0
    %v182 = vsel %vm150, 1, 0
    %v183 = vsel %vm151, 1, 0
    %v184 = vsel %vm152, 1, 0
    %v185 = vsel %vm153, 1, 0
    %v186 = vsel %vm154, 1, 0
    %v187 = vsel %vm155, 1, 0
    %v188 = vsel %vm156, 1, 0
    %v189 = vsel %vm157, 1, 0
    %v190 = vsel %vm158, 1, 0
    %v191 = vsel %vm159, 1, 0
    %v192 = vsel %vm160, 1, 0
    %v193 = vsel %vm161, 1, 0
    %v194 = vsel %vm162, 1, 0
    %v195 = vsel %vm163, 1, 0
    %v196 = vsel %vm164, 1, 0
    %v197 = vsel %vm165, 1, 0
    %v198 = vsel %vm166, 1, 0
    %v199 = vsel %vm167, 1, 0
    %v200 = vsel %vm168, 1, 0
    %v201 = vsel %vm169, 1, 0
    %v202 = vsel %vm170, 1, 0
    %v203 = vsel %vm171, 1, 0
    %v204 = vsel %vm172, 1, 0
    %v205 = vsel %vm173, 1, 0
    %v206 = vcvt.s32.f32 %v174
    %v207 = vcvt.s32.f32 %v175
    %v208 = vcvt.s32.f32 %v176
    %v209 = vcvt.s32.f32 %v177
    %v210 = vcvt.s32.f32 %v178
    %v211 = vcvt.s32.f32 %v179
    %v212 = vcvt.s32.f32 %v180
    %v213 = vcvt.s32.f32 %v181
    %v214 = vcvt.s32.f32 %v182
    %v215 = vcvt.s32.f32 %v183
    %v216 = vcvt.s32.f32 %v184
    %v217 = vcvt.s32.f32 %v185
    %v218 = vcvt.s32.f32 %v186
    %v219 = vcvt.s32.f32 %v187
    %v220 = vcvt.s32.f32 %v188
    %v221 = vcvt.s32.f32 %v189
    %v222 = vcvt.s32.f32 %v190
    %v223 = vcvt.s32.f32 %v191
    %v224 = vcvt.s32.f32 %v192
    %v225 = vcvt.s32.f32 %v193
    %v226 = vcvt.s32.f32 %v194
    %v227 = vcvt.s32.f32 %v195
    %v228 = vcvt.s32.f32 %v196
    %v229 = vcvt.s32.f32 %v197
    %v230 = vcvt.s32.f32 %v198
    %v231 = vcvt.s32.f32 %v199
    %v232 = vcvt.s32.f32 %v200
    %v233 = vcvt.s32.f32 %v201
    %v234 = vcvt.s32.f32 %v202
    %v235 = vcvt.s32.f32 %v203
    %v236 = vcvt.s32.f32 %v204
    %v237 = vcvt.s32.f32 %v205
    %v238 = vld [vmem:[%s1] sm:$0xff]
    %v239 = vld [vmem:[%s1 + $0x8] sm:$0xff]
    %v240 = vld [vmem:[%s1 + $0x10] sm:$0xff]
    %v241 = vld [vmem:[%s1 + $0x18] sm:$0xff]
    %v242 = vld [vmem:[%s1 + $0x20] sm:$0xff]
    %v243 = vld [vmem:[%s1 + $0x28] sm:$0xff]
    %v244 = vld [vmem:[%s1 + $0x30] sm:$0xff]
    %v245 = vld [vmem:[%s1 + $0x38] sm:$0xff]
    %v246 = vld [vmem:[%s1 + $0x40] sm:$0xff]
    %v247 = vld [vmem:[%s1 + $0x48] sm:$0xff]
    %v248 = vld [vmem:[%s1 + $0x50] sm:$0xff]
    %v249 = vld [vmem:[%s1 + $0x58] sm:$0xff]
    %v250 = vld [vmem:[%s1 + $0x60] sm:$0xff]
    %v251 = vld [vmem:[%s1 + $0x68] sm:$0xff]
    %v252 = vld [vmem:[%s1 + $0x70] sm:$0xff]
    %v253 = vld [vmem:[%s1 + $0x78] sm:$0xff]
    %v254 = vand.u32 %v253, 4294901760
    %255 = vmatpush.msra.mxu0 %v254
    %v256 = vand.u32 %v252, 4294901760
    %257 = vmatpush.msra.mxu0 %v256
    %v258 = vand.u32 %v251, 4294901760
    %259 = vmatpush.msra.mxu0 %v258
    %v260 = vand.u32 %v250, 4294901760
    %261 = vmatpush.msra.mxu0 %v260
    %v262 = vand.u32 %v249, 4294901760
    %263 = vmatpush.msra.mxu0 %v262
    %v264 = vand.u32 %v248, 4294901760
    %265 = vmatpush.msra.mxu0 %v264
    %v266 = vand.u32 %v247, 4294901760
    %267 = vmatpush.msra.mxu0 %v266
    %v268 = vand.u32 %v246, 4294901760
    %269 = vmatpush.msra.mxu0 %v268
    %v270 = vand.u32 %v245, 4294901760
    %271 = vmatpush.msra.mxu0 %v270
    %v272 = vand.u32 %v244, 4294901760
    %273 = vmatpush.msra.mxu0 %v272
    %v274 = vand.u32 %v243, 4294901760
    %275 = vmatpush.msra.mxu0 %v274
    %v276 = vand.u32 %v242, 4294901760
    %277 = vmatpush.msra.mxu0 %v276
    %v278 = vand.u32 %v241, 4294901760
    %279 = vmatpush.msra.mxu0 %v278
    %v280 = vand.u32 %v240, 4294901760
    %281 = vmatpush.msra.mxu0 %v280
    %v282 = vand.u32 %v239, 4294901760
    %283 = vmatpush.msra.mxu0 %v282
    %v284 = vand.u32 %v238, 4294901760
    %285 = vmatpush.msra.mxu0 %v284
    %v286 = vand.u32 %v206, 4294901760
    %v287 = vsub.f32 %v206, %v286
    %v288 = vand.u32 %v287, 4294901760
    %v289 = vsub.f32 %v287, %v288
    %v290 = vand.u32 %v289, 4294901760
    %291 = vmatmul.f32.gmra.mxu0 %v290
    %v292 = vpop.f32.mrf.mxu0
    %v293 = vadd.f32 0.0, %v292
    %v294 = vand.u32 %v207, 4294901760
    %v295 = vsub.f32 %v207, %v294
    %v296 = vand.u32 %v295, 4294901760
    %v297 = vsub.f32 %v295, %v296
    %v298 = vand.u32 %v297, 4294901760
    %299 = vmatmul.f32.gmra.mxu0 %v298
    %v300 = vpop.f32.mrf.mxu0
    %v301 = vadd.f32 0.0, %v300
    %v302 = vand.u32 %v208, 4294901760
    %v303 = vsub.f32 %v208, %v302
    %v304 = vand.u32 %v303, 4294901760
    %v305 = vsub.f32 %v303, %v304
    %v306 = vand.u32 %v305, 4294901760
    %307 = vmatmul.f32.gmra.mxu0 %v306
    %v308 = vpop.f32.mrf.mxu0
    %v309 = vadd.f32 0.0, %v308
    %v310 = vand.u32 %v209, 4294901760
    %v311 = vsub.f32 %v209, %v310
    %v312 = vand.u32 %v311, 4294901760
    %v313 = vsub.f32 %v311, %v312
    %v314 = vand.u32 %v313, 4294901760
    %315 = vmatmul.f32.gmra.mxu0 %v314
    %v316 = vpop.f32.mrf.mxu0
    %v317 = vadd.f32 0.0, %v316
    %v318 = vand.u32 %v210, 4294901760
    %v319 = vsub.f32 %v210, %v318
    %v320 = vand.u32 %v319, 4294901760
    %v321 = vsub.f32 %v319, %v320
    %v322 = vand.u32 %v321, 4294901760
    %323 = vmatmul.f32.gmra.mxu0 %v322
    %v324 = vpop.f32.mrf.mxu0
    %v325 = vadd.f32 0.0, %v324
    %v326 = vand.u32 %v211, 4294901760
    %v327 = vsub.f32 %v211, %v326
    %v328 = vand.u32 %v327, 4294901760
    %v329 = vsub.f32 %v327, %v328
    %v330 = vand.u32 %v329, 4294901760
    %331 = vmatmul.f32.gmra.mxu0 %v330
    %v332 = vpop.f32.mrf.mxu0
    %v333 = vadd.f32 0.0, %v332
    %v334 = vand.u32 %v212, 4294901760
    %v335 = vsub.f32 %v212, %v334
    %v336 = vand.u32 %v335, 4294901760
    %v337 = vsub.f32 %v335, %v336
    %v338 = vand.u32 %v337, 4294901760
    %339 = vmatmul.f32.gmra.mxu0 %v338
    %v340 = vpop.f32.mrf.mxu0
    %v341 = vadd.f32 0.0, %v340
    %v342 = vand.u32 %v213, 4294901760
    %v343 = vsub.f32 %v213, %v342
    %v344 = vand.u32 %v343, 4294901760
    %v345 = vsub.f32 %v343, %v344
    %v346 = vand.u32 %v345, 4294901760
    %347 = vmatmul.f32.gmra.mxu0 %v346
    %v348 = vpop.f32.mrf.mxu0
    %v349 = vadd.f32 0.0, %v348
    %v350 = vand.u32 %v214, 4294901760
    %v351 = vsub.f32 %v214, %v350
    %v352 = vand.u32 %v351, 4294901760
    %v353 = vsub.f32 %v351, %v352
    %v354 = vand.u32 %v353, 4294901760
    %355 = vmatmul.f32.gmra.mxu0 %v354
    %v356 = vpop.f32.mrf.mxu0
    %v357 = vadd.f32 0.0, %v356
    %v358 = vand.u32 %v215, 4294901760
    %v359 = vsub.f32 %v215, %v358
    %v360 = vand.u32 %v359, 4294901760
    %v361 = vsub.f32 %v359, %v360
    %v362 = vand.u32 %v361, 4294901760
    %363 = vmatmul.f32.gmra.mxu0 %v362
    %v364 = vpop.f32.mrf.mxu0
    %v365 = vadd.f32 0.0, %v364
    %v366 = vand.u32 %v216, 4294901760
    %v367 = vsub.f32 %v216, %v366
    %v368 = vand.u32 %v367, 4294901760
    %v369 = vsub.f32 %v367, %v368
    %v370 = vand.u32 %v369, 4294901760
    %371 = vmatmul.f32.gmra.mxu0 %v370
    %v372 = vpop.f32.mrf.mxu0
    %v373 = vadd.f32 0.0, %v372
    %v374 = vand.u32 %v217, 4294901760
    %v375 = vsub.f32 %v217, %v374
    %v376 = vand.u32 %v375, 4294901760
    %v377 = vsub.f32 %v375, %v376
    %v378 = vand.u32 %v377, 4294901760
    %379 = vmatmul.f32.gmra.mxu0 %v378
    %v380 = vpop.f32.mrf.mxu0
    %v381 = vadd.f32 0.0, %v380
    %v382 = vand.u32 %v218, 4294901760
    %v383 = vsub.f32 %v218, %v382
    %v384 = vand.u32 %v383, 4294901760
    %v385 = vsub.f32 %v383, %v384
    %v386 = vand.u32 %v385, 4294901760
    %387 = vmatmul.f32.gmra.mxu0 %v386
    %v388 = vpop.f32.mrf.mxu0
    %v389 = vadd.f32 0.0, %v388
    %v390 = vand.u32 %v219, 4294901760
    %v391 = vsub.f32 %v219, %v390
    %v392 = vand.u32 %v391, 4294901760
    %v393 = vsub.f32 %v391, %v392
    %v394 = vand.u32 %v393, 4294901760
    %395 = vmatmul.f32.gmra.mxu0 %v394
    %v396 = vpop.f32.mrf.mxu0
    %v397 = vadd.f32 0.0, %v396
    %v398 = vand.u32 %v220, 4294901760
    %v399 = vsub.f32 %v220, %v398
    %v400 = vand.u32 %v399, 4294901760
    %v401 = vsub.f32 %v399, %v400
    %v402 = vand.u32 %v401, 4294901760
    %403 = vmatmul.f32.gmra.mxu0 %v402
    %v404 = vpop.f32.mrf.mxu0
    %v405 = vadd.f32 0.0, %v404
    %v406 = vand.u32 %v221, 4294901760
    %v407 = vsub.f32 %v221, %v406
    %v408 = vand.u32 %v407, 4294901760
    %v409 = vsub.f32 %v407, %v408
    %v410 = vand.u32 %v409, 4294901760
    %411 = vmatmul.f32.gmra.mxu0 %v410
    %v412 = vpop.f32.mrf.mxu0
    %v413 = vadd.f32 0.0, %v412
    %v414 = vand.u32 %v222, 4294901760
    %v415 = vsub.f32 %v222, %v414
    %v416 = vand.u32 %v415, 4294901760
    %v417 = vsub.f32 %v415, %v416
    %v418 = vand.u32 %v417, 4294901760
    %419 = vmatmul.f32.gmra.mxu0 %v418
    %v420 = vpop.f32.mrf.mxu0
    %v421 = vadd.f32 0.0, %v420
    %v422 = vand.u32 %v223, 4294901760
    %v423 = vsub.f32 %v223, %v422
    %v424 = vand.u32 %v423, 4294901760
    %v425 = vsub.f32 %v423, %v424
    %v426 = vand.u32 %v425, 4294901760
    %427 = vmatmul.f32.gmra.mxu0 %v426
    %v428 = vpop.f32.mrf.mxu0
    %v429 = vadd.f32 0.0, %v428
    %v430 = vand.u32 %v224, 4294901760
    %v431 = vsub.f32 %v224, %v430
    %v432 = vand.u32 %v431, 4294901760
    %v433 = vsub.f32 %v431, %v432
    %v434 = vand.u32 %v433, 4294901760
    %435 = vmatmul.f32.gmra.mxu0 %v434
    %v436 = vpop.f32.mrf.mxu0
    %v437 = vadd.f32 0.0, %v436
    %v438 = vand.u32 %v225, 4294901760
    %v439 = vsub.f32 %v225, %v438
    %v440 = vand.u32 %v439, 4294901760
    %v441 = vsub.f32 %v439, %v440
    %v442 = vand.u32 %v441, 4294901760
    %443 = vmatmul.f32.gmra.mxu0 %v442
    %v444 = vpop.f32.mrf.mxu0
    %v445 = vadd.f32 0.0, %v444
    %v446 = vand.u32 %v226, 4294901760
    %v447 = vsub.f32 %v226, %v446
    %v448 = vand.u32 %v447, 4294901760
    %v449 = vsub.f32 %v447, %v448
    %v450 = vand.u32 %v449, 4294901760
    %451 = vmatmul.f32.gmra.mxu0 %v450
    %v452 = vpop.f32.mrf.mxu0
    %v453 = vadd.f32 0.0, %v452
    %v454 = vand.u32 %v227, 4294901760
    %v455 = vsub.f32 %v227, %v454
    %v456 = vand.u32 %v455, 4294901760
    %v457 = vsub.f32 %v455, %v456
    %v458 = vand.u32 %v457, 4294901760
    %459 = vmatmul.f32.gmra.mxu0 %v458
    %v460 = vpop.f32.mrf.mxu0
    %v461 = vadd.f32 0.0, %v460
    %v462 = vand.u32 %v228, 4294901760
    %v463 = vsub.f32 %v228, %v462
    %v464 = vand.u32 %v463, 4294901760
    %v465 = vsub.f32 %v463, %v464
    %v466 = vand.u32 %v465, 4294901760
    %467 = vmatmul.f32.gmra.mxu0 %v466
    %v468 = vpop.f32.mrf.mxu0
    %v469 = vadd.f32 0.0, %v468
    %v470 = vand.u32 %v229, 4294901760
    %v471 = vsub.f32 %v229, %v470
    %v472 = vand.u32 %v471, 4294901760
    %v473 = vsub.f32 %v471, %v472
    %v474 = vand.u32 %v473, 4294901760
    %475 = vmatmul.f32.gmra.mxu0 %v474
    %v476 = vpop.f32.mrf.mxu0
    %v477 = vadd.f32 0.0, %v476
    %v478 = vand.u32 %v230, 4294901760
    %v479 = vsub.f32 %v230, %v478
    %v480 = vand.u32 %v479, 4294901760
    %v481 = vsub.f32 %v479, %v480
    %v482 = vand.u32 %v481, 4294901760
    %483 = vmatmul.f32.gmra.mxu0 %v482
    %v484 = vpop.f32.mrf.mxu0
    %v485 = vadd.f32 0.0, %v484
    %v486 = vand.u32 %v231, 4294901760
    %v487 = vsub.f32 %v231, %v486
    %v488 = vand.u32 %v487, 4294901760
    %v489 = vsub.f32 %v487, %v488
    %v490 = vand.u32 %v489, 4294901760
    %491 = vmatmul.f32.gmra.mxu0 %v490
    %v492 = vpop.f32.mrf.mxu0
    %v493 = vadd.f32 0.0, %v492
    %v494 = vand.u32 %v232, 4294901760
    %v495 = vsub.f32 %v232, %v494
    %v496 = vand.u32 %v495, 4294901760
    %v497 = vsub.f32 %v495, %v496
    %v498 = vand.u32 %v497, 4294901760
    %499 = vmatmul.f32.gmra.mxu0 %v498
    %v500 = vpop.f32.mrf.mxu0
    %v501 = vadd.f32 0.0, %v500
    %v502 = vand.u32 %v233, 4294901760
    %v503 = vsub.f32 %v233, %v502
    %v504 = vand.u32 %v503, 4294901760
    %v505 = vsub.f32 %v503, %v504
    %v506 = vand.u32 %v505, 4294901760
    %507 = vmatmul.f32.gmra.mxu0 %v506
    %v508 = vpop.f32.mrf.mxu0
    %v509 = vadd.f32 0.0, %v508
    %v510 = vand.u32 %v234, 4294901760
    %v511 = vsub.f32 %v234, %v510
    %v512 = vand.u32 %v511, 4294901760
    %v513 = vsub.f32 %v511, %v512
    %v514 = vand.u32 %v513, 4294901760
    %515 = vmatmul.f32.gmra.mxu0 %v514
    %v516 = vpop.f32.mrf.mxu0
    %v517 = vadd.f32 0.0, %v516
    %v518 = vand.u32 %v235, 4294901760
    %v519 = vsub.f32 %v235, %v518
    %v520 = vand.u32 %v519, 4294901760
    %v521 = vsub.f32 %v519, %v520
    %v522 = vand.u32 %v521, 4294901760
    %523 = vmatmul.f32.gmra.mxu0 %v522
    %v524 = vpop.f32.mrf.mxu0
    %v525 = vadd.f32 0.0, %v524
    %v526 = vand.u32 %v236, 4294901760
    %v527 = vsub.f32 %v236, %v526
    %v528 = vand.u32 %v527, 4294901760
    %v529 = vsub.f32 %v527, %v528
    %v530 = vand.u32 %v529, 4294901760
    %531 = vmatmul.f32.gmra.mxu0 %v530
    %v532 = vpop.f32.mrf.mxu0
    %v533 = vadd.f32 0.0, %v532
    %v534 = vand.u32 %v237, 4294901760
    %v535 = vsub.f32 %v237, %v534
    %v536 = vand.u32 %v535, 4294901760
    %v537 = vsub.f32 %v535, %v536
    %v538 = vand.u32 %v537, 4294901760
    %539 = vmatmul.f32.gmra.mxu0 %v538
    %v540 = vpop.f32.mrf.mxu0
    %v541 = vadd.f32 0.0, %v540
    %542 = vdwg.mxu0
    %v543 = vand.u32 %v253, 4294901760
    %v544 = vsub.f32 %v253, %v543
    %v545 = vand.u32 %v544, 4294901760
    %v546 = vsub.f32 %v544, %v545
    %v547 = vand.u32 %v546, 4294901760
    %548 = vmatpush.msra.mxu0 %v547
    %v549 = vand.u32 %v252, 4294901760
    %v550 = vsub.f32 %v252, %v549
    %v551 = vand.u32 %v550, 4294901760
    %v552 = vsub.f32 %v550, %v551
    %v553 = vand.u32 %v552, 4294901760
    %554 = vmatpush.msra.mxu0 %v553
    %v555 = vand.u32 %v251, 4294901760
    %v556 = vsub.f32 %v251, %v555
    %v557 = vand.u32 %v556, 4294901760
    %v558 = vsub.f32 %v556, %v557
    %v559 = vand.u32 %v558, 4294901760
    %560 = vmatpush.msra.mxu0 %v559
    %v561 = vand.u32 %v250, 4294901760
    %v562 = vsub.f32 %v250, %v561
    %v563 = vand.u32 %v562, 4294901760
    %v564 = vsub.f32 %v562, %v563
    %v565 = vand.u32 %v564, 4294901760
    %566 = vmatpush.msra.mxu0 %v565
    %v567 = vand.u32 %v249, 4294901760
    %v568 = vsub.f32 %v249, %v567
    %v569 = vand.u32 %v568, 4294901760
    %v570 = vsub.f32 %v568, %v569
    %v571 = vand.u32 %v570, 4294901760
    %572 = vmatpush.msra.mxu0 %v571
    %v573 = vand.u32 %v248, 4294901760
    %v574 = vsub.f32 %v248, %v573
    %v575 = vand.u32 %v574, 4294901760
    %v576 = vsub.f32 %v574, %v575
    %v577 = vand.u32 %v576, 4294901760
    %578 = vmatpush.msra.mxu0 %v577
    %v579 = vand.u32 %v247, 4294901760
    %v580 = vsub.f32 %v247, %v579
    %v581 = vand.u32 %v580, 4294901760
    %v582 = vsub.f32 %v580, %v581
    %v583 = vand.u32 %v582, 4294901760
    %584 = vmatpush.msra.mxu0 %v583
    %v585 = vand.u32 %v246, 4294901760
    %v586 = vsub.f32 %v246, %v585
    %v587 = vand.u32 %v586, 4294901760
    %v588 = vsub.f32 %v586, %v587
    %v589 = vand.u32 %v588, 4294901760
    %590 = vmatpush.msra.mxu0 %v589
    %v591 = vand.u32 %v245, 4294901760
    %v592 = vsub.f32 %v245, %v591
    %v593 = vand.u32 %v592, 4294901760
    %v594 = vsub.f32 %v592, %v593
    %v595 = vand.u32 %v594, 4294901760
    %596 = vmatpush.msra.mxu0 %v595
    %v597 = vand.u32 %v244, 4294901760
    %v598 = vsub.f32 %v244, %v597
    %v599 = vand.u32 %v598, 4294901760
    %v600 = vsub.f32 %v598, %v599
    %v601 = vand.u32 %v600, 4294901760
    %602 = vmatpush.msra.mxu0 %v601
    %v603 = vand.u32 %v243, 4294901760
    %v604 = vsub.f32 %v243, %v603
    %v605 = vand.u32 %v604, 4294901760
    %v606 = vsub.f32 %v604, %v605
    %v607 = vand.u32 %v606, 4294901760
    %608 = vmatpush.msra.mxu0 %v607
    %v609 = vand.u32 %v242, 4294901760
    %v610 = vsub.f32 %v242, %v609
    %v611 = vand.u32 %v610, 4294901760
    %v612 = vsub.f32 %v610, %v611
    %v613 = vand.u32 %v612, 4294901760
    %614 = vmatpush.msra.mxu0 %v613
    %v615 = vand.u32 %v241, 4294901760
    %v616 = vsub.f32 %v241, %v615
    %v617 = vand.u32 %v616, 4294901760
    %v618 = vsub.f32 %v616, %v617
    %v619 = vand.u32 %v618, 4294901760
    %620 = vmatpush.msra.mxu0 %v619
    %v621 = vand.u32 %v240, 4294901760
    %v622 = vsub.f32 %v240, %v621
    %v623 = vand.u32 %v622, 4294901760
    %v624 = vsub.f32 %v622, %v623
    %v625 = vand.u32 %v624, 4294901760
    %626 = vmatpush.msra.mxu0 %v625
    %v627 = vand.u32 %v239, 4294901760
    %v628 = vsub.f32 %v239, %v627
    %v629 = vand.u32 %v628, 4294901760
    %v630 = vsub.f32 %v628, %v629
    %v631 = vand.u32 %v630, 4294901760
    %632 = vmatpush.msra.mxu0 %v631
    %v633 = vand.u32 %v238, 4294901760
    %v634 = vsub.f32 %v238, %v633
    %v635 = vand.u32 %v634, 4294901760
    %v636 = vsub.f32 %v634, %v635
    %v637 = vand.u32 %v636, 4294901760
    %638 = vmatpush.msra.mxu0 %v637
    %v639 = vand.u32 %v206, 4294901760
    %640 = vmatmul.f32.gmra.mxu0 %v639
    %v641 = vpop.f32.mrf.mxu0
    %v642 = vadd.f32 %v293, %v641
    %v643 = vand.u32 %v207, 4294901760
    %644 = vmatmul.f32.gmra.mxu0 %v643
    %v645 = vpop.f32.mrf.mxu0
    %v646 = vadd.f32 %v301, %v645
    %v647 = vand.u32 %v208, 4294901760
    %648 = vmatmul.f32.gmra.mxu0 %v647
    %v649 = vpop.f32.mrf.mxu0
    %v650 = vadd.f32 %v309, %v649
    %v651 = vand.u32 %v209, 4294901760
    %652 = vmatmul.f32.gmra.mxu0 %v651
    %v653 = vpop.f32.mrf.mxu0
    %v654 = vadd.f32 %v317, %v653
    %v655 = vand.u32 %v210, 4294901760
    %656 = vmatmul.f32.gmra.mxu0 %v655
    %v657 = vpop.f32.mrf.mxu0
    %v658 = vadd.f32 %v325, %v657
    %v659 = vand.u32 %v211, 4294901760
    %660 = vmatmul.f32.gmra.mxu0 %v659
    %v661 = vpop.f32.mrf.mxu0
    %v662 = vadd.f32 %v333, %v661
    %v663 = vand.u32 %v212, 4294901760
    %664 = vmatmul.f32.gmra.mxu0 %v663
    %v665 = vpop.f32.mrf.mxu0
    %v666 = vadd.f32 %v341, %v665
    %v667 = vand.u32 %v213, 4294901760
    %668 = vmatmul.f32.gmra.mxu0 %v667
    %v669 = vpop.f32.mrf.mxu0
    %v670 = vadd.f32 %v349, %v669
    %v671 = vand.u32 %v214, 4294901760
    %672 = vmatmul.f32.gmra.mxu0 %v671
    %v673 = vpop.f32.mrf.mxu0
    %v674 = vadd.f32 %v357, %v673
    %v675 = vand.u32 %v215, 4294901760
    %676 = vmatmul.f32.gmra.mxu0 %v675
    %v677 = vpop.f32.mrf.mxu0
    %v678 = vadd.f32 %v365, %v677
    %v679 = vand.u32 %v216, 4294901760
    %680 = vmatmul.f32.gmra.mxu0 %v679
    %v681 = vpop.f32.mrf.mxu0
    %v682 = vadd.f32 %v373, %v681
    %v683 = vand.u32 %v217, 4294901760
    %684 = vmatmul.f32.gmra.mxu0 %v683
    %v685 = vpop.f32.mrf.mxu0
    %v686 = vadd.f32 %v381, %v685
    %v687 = vand.u32 %v218, 4294901760
    %688 = vmatmul.f32.gmra.mxu0 %v687
    %v689 = vpop.f32.mrf.mxu0
    %v690 = vadd.f32 %v389, %v689
    %v691 = vand.u32 %v219, 4294901760
    %692 = vmatmul.f32.gmra.mxu0 %v691
    %v693 = vpop.f32.mrf.mxu0
    %v694 = vadd.f32 %v397, %v693
    %v695 = vand.u32 %v220, 4294901760
    %696 = vmatmul.f32.gmra.mxu0 %v695
    %v697 = vpop.f32.mrf.mxu0
    %v698 = vadd.f32 %v405, %v697
    %v699 = vand.u32 %v221, 4294901760
    %700 = vmatmul.f32.gmra.mxu0 %v699
    %v701 = vpop.f32.mrf.mxu0
    %v702 = vadd.f32 %v413, %v701
    %v703 = vand.u32 %v222, 4294901760
    %704 = vmatmul.f32.gmra.mxu0 %v703
    %v705 = vpop.f32.mrf.mxu0
    %v706 = vadd.f32 %v421, %v705
    %v707 = vand.u32 %v223, 4294901760
    %708 = vmatmul.f32.gmra.mxu0 %v707
    %v709 = vpop.f32.mrf.mxu0
    %v710 = vadd.f32 %v429, %v709
    %v711 = vand.u32 %v224, 4294901760
    %712 = vmatmul.f32.gmra.mxu0 %v711
    %v713 = vpop.f32.mrf.mxu0
    %v714 = vadd.f32 %v437, %v713
    %v715 = vand.u32 %v225, 4294901760
    %716 = vmatmul.f32.gmra.mxu0 %v715
    %v717 = vpop.f32.mrf.mxu0
    %v718 = vadd.f32 %v445, %v717
    %v719 = vand.u32 %v226, 4294901760
    %720 = vmatmul.f32.gmra.mxu0 %v719
    %v721 = vpop.f32.mrf.mxu0
    %v722 = vadd.f32 %v453, %v721
    %v723 = vand.u32 %v227, 4294901760
    %724 = vmatmul.f32.gmra.mxu0 %v723
    %v725 = vpop.f32.mrf.mxu0
    %v726 = vadd.f32 %v461, %v725
    %v727 = vand.u32 %v228, 4294901760
    %728 = vmatmul.f32.gmra.mxu0 %v727
    %v729 = vpop.f32.mrf.mxu0
    %v730 = vadd.f32 %v469, %v729
    %v731 = vand.u32 %v229, 4294901760
    %732 = vmatmul.f32.gmra.mxu0 %v731
    %v733 = vpop.f32.mrf.mxu0
    %v734 = vadd.f32 %v477, %v733
    %v735 = vand.u32 %v230, 4294901760
    %736 = vmatmul.f32.gmra.mxu0 %v735
    %v737 = vpop.f32.mrf.mxu0
    %v738 = vadd.f32 %v485, %v737
    %v739 = vand.u32 %v231, 4294901760
    %740 = vmatmul.f32.gmra.mxu0 %v739
    %v741 = vpop.f32.mrf.mxu0
    %v742 = vadd.f32 %v493, %v741
    %v743 = vand.u32 %v232, 4294901760
    %744 = vmatmul.f32.gmra.mxu0 %v743
    %v745 = vpop.f32.mrf.mxu0
    %v746 = vadd.f32 %v501, %v745
    %v747 = vand.u32 %v233, 4294901760
    %748 = vmatmul.f32.gmra.mxu0 %v747
    %v749 = vpop.f32.mrf.mxu0
    %v750 = vadd.f32 %v509, %v749
    %v751 = vand.u32 %v234, 4294901760
    %752 = vmatmul.f32.gmra.mxu0 %v751
    %v753 = vpop.f32.mrf.mxu0
    %v754 = vadd.f32 %v517, %v753
    %v755 = vand.u32 %v235, 4294901760
    %756 = vmatmul.f32.gmra.mxu0 %v755
    %v757 = vpop.f32.mrf.mxu0
    %v758 = vadd.f32 %v525, %v757
    %v759 = vand.u32 %v236, 4294901760
    %760 = vmatmul.f32.gmra.mxu0 %v759
    %v761 = vpop.f32.mrf.mxu0
    %v762 = vadd.f32 %v533, %v761
    %v763 = vand.u32 %v237, 4294901760
    %764 = vmatmul.f32.gmra.mxu0 %v763
    %v765 = vpop.f32.mrf.mxu0
    %v766 = vadd.f32 %v541, %v765
    %767 = vdwg.mxu0
    %v768 = vand.u32 %v253, 4294901760
    %v769 = vsub.f32 %v253, %v768
    %770 = vmatpush.msra.mxu0 %v769
    %v771 = vand.u32 %v252, 4294901760
    %v772 = vsub.f32 %v252, %v771
    %773 = vmatpush.msra.mxu0 %v772
    %v774 = vand.u32 %v251, 4294901760
    %v775 = vsub.f32 %v251, %v774
    %776 = vmatpush.msra.mxu0 %v775
    %v777 = vand.u32 %v250, 4294901760
    %v778 = vsub.f32 %v250, %v777
    %779 = vmatpush.msra.mxu0 %v778
    %v780 = vand.u32 %v249, 4294901760
    %v781 = vsub.f32 %v249, %v780
    %782 = vmatpush.msra.mxu0 %v781
    %v783 = vand.u32 %v248, 4294901760
    %v784 = vsub.f32 %v248, %v783
    %785 = vmatpush.msra.mxu0 %v784
    %v786 = vand.u32 %v247, 4294901760
    %v787 = vsub.f32 %v247, %v786
    %788 = vmatpush.msra.mxu0 %v787
    %v789 = vand.u32 %v246, 4294901760
    %v790 = vsub.f32 %v246, %v789
    %791 = vmatpush.msra.mxu0 %v790
    %v792 = vand.u32 %v245, 4294901760
    %v793 = vsub.f32 %v245, %v792
    %794 = vmatpush.msra.mxu0 %v793
    %v795 = vand.u32 %v244, 4294901760
    %v796 = vsub.f32 %v244, %v795
    %797 = vmatpush.msra.mxu0 %v796
    %v798 = vand.u32 %v243, 4294901760
    %v799 = vsub.f32 %v243, %v798
    %800 = vmatpush.msra.mxu0 %v799
    %v801 = vand.u32 %v242, 4294901760
    %v802 = vsub.f32 %v242, %v801
    %803 = vmatpush.msra.mxu0 %v802
    %v804 = vand.u32 %v241, 4294901760
    %v805 = vsub.f32 %v241, %v804
    %806 = vmatpush.msra.mxu0 %v805
    %v807 = vand.u32 %v240, 4294901760
    %v808 = vsub.f32 %v240, %v807
    %809 = vmatpush.msra.mxu0 %v808
    %v810 = vand.u32 %v239, 4294901760
    %v811 = vsub.f32 %v239, %v810
    %812 = vmatpush.msra.mxu0 %v811
    %v813 = vand.u32 %v238, 4294901760
    %v814 = vsub.f32 %v238, %v813
    %815 = vmatpush.msra.mxu0 %v814
    %v816 = vand.u32 %v206, 4294901760
    %v817 = vsub.f32 %v206, %v816
    %818 = vmatmul.f32.gmra.mxu0 %v817
    %v819 = vpop.f32.mrf.mxu0
    %v820 = vadd.f32 %v642, %v819
    %v821 = vand.u32 %v207, 4294901760
    %v822 = vsub.f32 %v207, %v821
    %823 = vmatmul.f32.gmra.mxu0 %v822
    %v824 = vpop.f32.mrf.mxu0
    %v825 = vadd.f32 %v646, %v824
    %v826 = vand.u32 %v208, 4294901760
    %v827 = vsub.f32 %v208, %v826
    %828 = vmatmul.f32.gmra.mxu0 %v827
    %v829 = vpop.f32.mrf.mxu0
    %v830 = vadd.f32 %v650, %v829
    %v831 = vand.u32 %v209, 4294901760
    %v832 = vsub.f32 %v209, %v831
    %833 = vmatmul.f32.gmra.mxu0 %v832
    %v834 = vpop.f32.mrf.mxu0
    %v835 = vadd.f32 %v654, %v834
    %v836 = vand.u32 %v210, 4294901760
    %v837 = vsub.f32 %v210, %v836
    %838 = vmatmul.f32.gmra.mxu0 %v837
    %v839 = vpop.f32.mrf.mxu0
    %v840 = vadd.f32 %v658, %v839
    %v841 = vand.u32 %v211, 4294901760
    %v842 = vsub.f32 %v211, %v841
    %843 = vmatmul.f32.gmra.mxu0 %v842
    %v844 = vpop.f32.mrf.mxu0
    %v845 = vadd.f32 %v662, %v844
    %v846 = vand.u32 %v212, 4294901760
    %v847 = vsub.f32 %v212, %v846
    %848 = vmatmul.f32.gmra.mxu0 %v847
    %v849 = vpop.f32.mrf.mxu0
    %v850 = vadd.f32 %v666, %v849
    %v851 = vand.u32 %v213, 4294901760
    %v852 = vsub.f32 %v213, %v851
    %853 = vmatmul.f32.gmra.mxu0 %v852
    %v854 = vpop.f32.mrf.mxu0
    %v855 = vadd.f32 %v670, %v854
    %v856 = vand.u32 %v214, 4294901760
    %v857 = vsub.f32 %v214, %v856
    %858 = vmatmul.f32.gmra.mxu0 %v857
    %v859 = vpop.f32.mrf.mxu0
    %v860 = vadd.f32 %v674, %v859
    %v861 = vand.u32 %v215, 4294901760
    %v862 = vsub.f32 %v215, %v861
    %863 = vmatmul.f32.gmra.mxu0 %v862
    %v864 = vpop.f32.mrf.mxu0
    %v865 = vadd.f32 %v678, %v864
    %v866 = vand.u32 %v216, 4294901760
    %v867 = vsub.f32 %v216, %v866
    %868 = vmatmul.f32.gmra.mxu0 %v867
    %v869 = vpop.f32.mrf.mxu0
    %v870 = vadd.f32 %v682, %v869
    %v871 = vand.u32 %v217, 4294901760
    %v872 = vsub.f32 %v217, %v871
    %873 = vmatmul.f32.gmra.mxu0 %v872
    %v874 = vpop.f32.mrf.mxu0
    %v875 = vadd.f32 %v686, %v874
    %v876 = vand.u32 %v218, 4294901760
    %v877 = vsub.f32 %v218, %v876
    %878 = vmatmul.f32.gmra.mxu0 %v877
    %v879 = vpop.f32.mrf.mxu0
    %v880 = vadd.f32 %v690, %v879
    %v881 = vand.u32 %v219, 4294901760
    %v882 = vsub.f32 %v219, %v881
    %883 = vmatmul.f32.gmra.mxu0 %v882
    %v884 = vpop.f32.mrf.mxu0
    %v885 = vadd.f32 %v694, %v884
    %v886 = vand.u32 %v220, 4294901760
    %v887 = vsub.f32 %v220, %v886
    %888 = vmatmul.f32.gmra.mxu0 %v887
    %v889 = vpop.f32.mrf.mxu0
    %v890 = vadd.f32 %v698, %v889
    %v891 = vand.u32 %v221, 4294901760
    %v892 = vsub.f32 %v221, %v891
    %893 = vmatmul.f32.gmra.mxu0 %v892
    %v894 = vpop.f32.mrf.mxu0
    %v895 = vadd.f32 %v702, %v894
    %v896 = vand.u32 %v222, 4294901760
    %v897 = vsub.f32 %v222, %v896
    %898 = vmatmul.f32.gmra.mxu0 %v897
    %v899 = vpop.f32.mrf.mxu0
    %v900 = vadd.f32 %v706, %v899
    %v901 = vand.u32 %v223, 4294901760
    %v902 = vsub.f32 %v223, %v901
    %903 = vmatmul.f32.gmra.mxu0 %v902
    %v904 = vpop.f32.mrf.mxu0
    %v905 = vadd.f32 %v710, %v904
    %v906 = vand.u32 %v224, 4294901760
    %v907 = vsub.f32 %v224, %v906
    %908 = vmatmul.f32.gmra.mxu0 %v907
    %v909 = vpop.f32.mrf.mxu0
    %v910 = vadd.f32 %v714, %v909
    %v911 = vand.u32 %v225, 4294901760
    %v912 = vsub.f32 %v225, %v911
    %913 = vmatmul.f32.gmra.mxu0 %v912
    %v914 = vpop.f32.mrf.mxu0
    %v915 = vadd.f32 %v718, %v914
    %v916 = vand.u32 %v226, 4294901760
    %v917 = vsub.f32 %v226, %v916
    %918 = vmatmul.f32.gmra.mxu0 %v917
    %v919 = vpop.f32.mrf.mxu0
    %v920 = vadd.f32 %v722, %v919
    %v921 = vand.u32 %v227, 4294901760
    %v922 = vsub.f32 %v227, %v921
    %923 = vmatmul.f32.gmra.mxu0 %v922
    %v924 = vpop.f32.mrf.mxu0
    %v925 = vadd.f32 %v726, %v924
    %v926 = vand.u32 %v228, 4294901760
    %v927 = vsub.f32 %v228, %v926
    %928 = vmatmul.f32.gmra.mxu0 %v927
    %v929 = vpop.f32.mrf.mxu0
    %v930 = vadd.f32 %v730, %v929
    %v931 = vand.u32 %v229, 4294901760
    %v932 = vsub.f32 %v229, %v931
    %933 = vmatmul.f32.gmra.mxu0 %v932
    %v934 = vpop.f32.mrf.mxu0
    %v935 = vadd.f32 %v734, %v934
    %v936 = vand.u32 %v230, 4294901760
    %v937 = vsub.f32 %v230, %v936
    %938 = vmatmul.f32.gmra.mxu0 %v937
    %v939 = vpop.f32.mrf.mxu0
    %v940 = vadd.f32 %v738, %v939
    %v941 = vand.u32 %v231, 4294901760
    %v942 = vsub.f32 %v231, %v941
    %943 = vmatmul.f32.gmra.mxu0 %v942
    %v944 = vpop.f32.mrf.mxu0
    %v945 = vadd.f32 %v742, %v944
    %v946 = vand.u32 %v232, 4294901760
    %v947 = vsub.f32 %v232, %v946
    %948 = vmatmul.f32.gmra.mxu0 %v947
    %v949 = vpop.f32.mrf.mxu0
    %v950 = vadd.f32 %v746, %v949
    %v951 = vand.u32 %v233, 4294901760
    %v952 = vsub.f32 %v233, %v951
    %953 = vmatmul.f32.gmra.mxu0 %v952
    %v954 = vpop.f32.mrf.mxu0
    %v955 = vadd.f32 %v750, %v954
    %v956 = vand.u32 %v234, 4294901760
    %v957 = vsub.f32 %v234, %v956
    %958 = vmatmul.f32.gmra.mxu0 %v957
    %v959 = vpop.f32.mrf.mxu0
    %v960 = vadd.f32 %v754, %v959
    %v961 = vand.u32 %v235, 4294901760
    %v962 = vsub.f32 %v235, %v961
    %963 = vmatmul.f32.gmra.mxu0 %v962
    %v964 = vpop.f32.mrf.mxu0
    %v965 = vadd.f32 %v758, %v964
    %v966 = vand.u32 %v236, 4294901760
    %v967 = vsub.f32 %v236, %v966
    %968 = vmatmul.f32.gmra.mxu0 %v967
    %v969 = vpop.f32.mrf.mxu0
    %v970 = vadd.f32 %v762, %v969
    %v971 = vand.u32 %v237, 4294901760
    %v972 = vsub.f32 %v237, %v971
    %973 = vmatmul.f32.gmra.mxu0 %v972
    %v974 = vpop.f32.mrf.mxu0
    %v975 = vadd.f32 %v766, %v974
    %976 = vdwg.mxu0
    %v977 = vand.u32 %v253, 4294901760
    %978 = vmatpush.msra.mxu0 %v977
    %v979 = vand.u32 %v252, 4294901760
    %980 = vmatpush.msra.mxu0 %v979
    %v981 = vand.u32 %v251, 4294901760
    %982 = vmatpush.msra.mxu0 %v981
    %v983 = vand.u32 %v250, 4294901760
    %984 = vmatpush.msra.mxu0 %v983
    %v985 = vand.u32 %v249, 4294901760
    %986 = vmatpush.msra.mxu0 %v985
    %v987 = vand.u32 %v248, 4294901760
    %988 = vmatpush.msra.mxu0 %v987
    %v989 = vand.u32 %v247, 4294901760
    %990 = vmatpush.msra.mxu0 %v989
    %v991 = vand.u32 %v246, 4294901760
    %992 = vmatpush.msra.mxu0 %v991
    %v993 = vand.u32 %v245, 4294901760
    %994 = vmatpush.msra.mxu0 %v993
    %v995 = vand.u32 %v244, 4294901760
    %996 = vmatpush.msra.mxu0 %v995
    %v997 = vand.u32 %v243, 4294901760
    %998 = vmatpush.msra.mxu0 %v997
    %v999 = vand.u32 %v242, 4294901760
    %1000 = vmatpush.msra.mxu0 %v999
    %v1001 = vand.u32 %v241, 4294901760
    %1002 = vmatpush.msra.mxu0 %v1001
    %v1003 = vand.u32 %v240, 4294901760
    %1004 = vmatpush.msra.mxu0 %v1003
    %v1005 = vand.u32 %v239, 4294901760
    %1006 = vmatpush.msra.mxu0 %v1005
    %v1007 = vand.u32 %v238, 4294901760
    %1008 = vmatpush.msra.mxu0 %v1007
    %v1009 = vand.u32 %v206, 4294901760
    %v1010 = vsub.f32 %v206, %v1009
    %v1011 = vand.u32 %v1010, 4294901760
    %1012 = vmatmul.f32.gmra.mxu0 %v1011
    %v1013 = vpop.f32.mrf.mxu0
    %v1014 = vadd.f32 %v820, %v1013
    %v1015 = vand.u32 %v207, 4294901760
    %v1016 = vsub.f32 %v207, %v1015
    %v1017 = vand.u32 %v1016, 4294901760
    %1018 = vmatmul.f32.gmra.mxu0 %v1017
    %v1019 = vpop.f32.mrf.mxu0
    %v1020 = vadd.f32 %v825, %v1019
    %v1021 = vand.u32 %v208, 4294901760
    %v1022 = vsub.f32 %v208, %v1021
    %v1023 = vand.u32 %v1022, 4294901760
    %1024 = vmatmul.f32.gmra.mxu0 %v1023
    %v1025 = vpop.f32.mrf.mxu0
    %v1026 = vadd.f32 %v830, %v1025
    %v1027 = vand.u32 %v209, 4294901760
    %v1028 = vsub.f32 %v209, %v1027
    %v1029 = vand.u32 %v1028, 4294901760
    %1030 = vmatmul.f32.gmra.mxu0 %v1029
    %v1031 = vpop.f32.mrf.mxu0
    %v1032 = vadd.f32 %v835, %v1031
    %v1033 = vand.u32 %v210, 4294901760
    %v1034 = vsub.f32 %v210, %v1033
    %v1035 = vand.u32 %v1034, 4294901760
    %1036 = vmatmul.f32.gmra.mxu0 %v1035
    %v1037 = vpop.f32.mrf.mxu0
    %v1038 = vadd.f32 %v840, %v1037
    %v1039 = vand.u32 %v211, 4294901760
    %v1040 = vsub.f32 %v211, %v1039
    %v1041 = vand.u32 %v1040, 4294901760
    %1042 = vmatmul.f32.gmra.mxu0 %v1041
    %v1043 = vpop.f32.mrf.mxu0
    %v1044 = vadd.f32 %v845, %v1043
    %v1045 = vand.u32 %v212, 4294901760
    %v1046 = vsub.f32 %v212, %v1045
    %v1047 = vand.u32 %v1046, 4294901760
    %1048 = vmatmul.f32.gmra.mxu0 %v1047
    %v1049 = vpop.f32.mrf.mxu0
    %v1050 = vadd.f32 %v850, %v1049
    %v1051 = vand.u32 %v213, 4294901760
    %v1052 = vsub.f32 %v213, %v1051
    %v1053 = vand.u32 %v1052, 4294901760
    %1054 = vmatmul.f32.gmra.mxu0 %v1053
    %v1055 = vpop.f32.mrf.mxu0
    %v1056 = vadd.f32 %v855, %v1055
    %v1057 = vand.u32 %v214, 4294901760
    %v1058 = vsub.f32 %v214, %v1057
    %v1059 = vand.u32 %v1058, 4294901760
    %1060 = vmatmul.f32.gmra.mxu0 %v1059
    %v1061 = vpop.f32.mrf.mxu0
    %v1062 = vadd.f32 %v860, %v1061
    %v1063 = vand.u32 %v215, 4294901760
    %v1064 = vsub.f32 %v215, %v1063
    %v1065 = vand.u32 %v1064, 4294901760
    %1066 = vmatmul.f32.gmra.mxu0 %v1065
    %v1067 = vpop.f32.mrf.mxu0
    %v1068 = vadd.f32 %v865, %v1067
    %v1069 = vand.u32 %v216, 4294901760
    %v1070 = vsub.f32 %v216, %v1069
    %v1071 = vand.u32 %v1070, 4294901760
    %1072 = vmatmul.f32.gmra.mxu0 %v1071
    %v1073 = vpop.f32.mrf.mxu0
    %v1074 = vadd.f32 %v870, %v1073
    %v1075 = vand.u32 %v217, 4294901760
    %v1076 = vsub.f32 %v217, %v1075
    %v1077 = vand.u32 %v1076, 4294901760
    %1078 = vmatmul.f32.gmra.mxu0 %v1077
    %v1079 = vpop.f32.mrf.mxu0
    %v1080 = vadd.f32 %v875, %v1079
    %v1081 = vand.u32 %v218, 4294901760
    %v1082 = vsub.f32 %v218, %v1081
    %v1083 = vand.u32 %v1082, 4294901760
    %1084 = vmatmul.f32.gmra.mxu0 %v1083
    %v1085 = vpop.f32.mrf.mxu0
    %v1086 = vadd.f32 %v880, %v1085
    %v1087 = vand.u32 %v219, 4294901760
    %v1088 = vsub.f32 %v219, %v1087
    %v1089 = vand.u32 %v1088, 4294901760
    %1090 = vmatmul.f32.gmra.mxu0 %v1089
    %v1091 = vpop.f32.mrf.mxu0
    %v1092 = vadd.f32 %v885, %v1091
    %v1093 = vand.u32 %v220, 4294901760
    %v1094 = vsub.f32 %v220, %v1093
    %v1095 = vand.u32 %v1094, 4294901760
    %1096 = vmatmul.f32.gmra.mxu0 %v1095
    %v1097 = vpop.f32.mrf.mxu0
    %v1098 = vadd.f32 %v890, %v1097
    %v1099 = vand.u32 %v221, 4294901760
    %v1100 = vsub.f32 %v221, %v1099
    %v1101 = vand.u32 %v1100, 4294901760
    %1102 = vmatmul.f32.gmra.mxu0 %v1101
    %v1103 = vpop.f32.mrf.mxu0
    %v1104 = vadd.f32 %v895, %v1103
    %v1105 = vand.u32 %v222, 4294901760
    %v1106 = vsub.f32 %v222, %v1105
    %v1107 = vand.u32 %v1106, 4294901760
    %1108 = vmatmul.f32.gmra.mxu0 %v1107
    %v1109 = vpop.f32.mrf.mxu0
    %v1110 = vadd.f32 %v900, %v1109
    %v1111 = vand.u32 %v223, 4294901760
    %v1112 = vsub.f32 %v223, %v1111
    %v1113 = vand.u32 %v1112, 4294901760
    %1114 = vmatmul.f32.gmra.mxu0 %v1113
    %v1115 = vpop.f32.mrf.mxu0
    %v1116 = vadd.f32 %v905, %v1115
    %v1117 = vand.u32 %v224, 4294901760
    %v1118 = vsub.f32 %v224, %v1117
    %v1119 = vand.u32 %v1118, 4294901760
    %1120 = vmatmul.f32.gmra.mxu0 %v1119
    %v1121 = vpop.f32.mrf.mxu0
    %v1122 = vadd.f32 %v910, %v1121
    %v1123 = vand.u32 %v225, 4294901760
    %v1124 = vsub.f32 %v225, %v1123
    %v1125 = vand.u32 %v1124, 4294901760
    %1126 = vmatmul.f32.gmra.mxu0 %v1125
    %v1127 = vpop.f32.mrf.mxu0
    %v1128 = vadd.f32 %v915, %v1127
    %v1129 = vand.u32 %v226, 4294901760
    %v1130 = vsub.f32 %v226, %v1129
    %v1131 = vand.u32 %v1130, 4294901760
    %1132 = vmatmul.f32.gmra.mxu0 %v1131
    %v1133 = vpop.f32.mrf.mxu0
    %v1134 = vadd.f32 %v920, %v1133
    %v1135 = vand.u32 %v227, 4294901760
    %v1136 = vsub.f32 %v227, %v1135
    %v1137 = vand.u32 %v1136, 4294901760
    %1138 = vmatmul.f32.gmra.mxu0 %v1137
    %v1139 = vpop.f32.mrf.mxu0
    %v1140 = vadd.f32 %v925, %v1139
    %v1141 = vand.u32 %v228, 4294901760
    %v1142 = vsub.f32 %v228, %v1141
    %v1143 = vand.u32 %v1142, 4294901760
    %1144 = vmatmul.f32.gmra.mxu0 %v1143
    %v1145 = vpop.f32.mrf.mxu0
    %v1146 = vadd.f32 %v930, %v1145
    %v1147 = vand.u32 %v229, 4294901760
    %v1148 = vsub.f32 %v229, %v1147
    %v1149 = vand.u32 %v1148, 4294901760
    %1150 = vmatmul.f32.gmra.mxu0 %v1149
    %v1151 = vpop.f32.mrf.mxu0
    %v1152 = vadd.f32 %v935, %v1151
    %v1153 = vand.u32 %v230, 4294901760
    %v1154 = vsub.f32 %v230, %v1153
    %v1155 = vand.u32 %v1154, 4294901760
    %1156 = vmatmul.f32.gmra.mxu0 %v1155
    %v1157 = vpop.f32.mrf.mxu0
    %v1158 = vadd.f32 %v940, %v1157
    %v1159 = vand.u32 %v231, 4294901760
    %v1160 = vsub.f32 %v231, %v1159
    %v1161 = vand.u32 %v1160, 4294901760
    %1162 = vmatmul.f32.gmra.mxu0 %v1161
    %v1163 = vpop.f32.mrf.mxu0
    %v1164 = vadd.f32 %v945, %v1163
    %v1165 = vand.u32 %v232, 4294901760
    %v1166 = vsub.f32 %v232, %v1165
    %v1167 = vand.u32 %v1166, 4294901760
    %1168 = vmatmul.f32.gmra.mxu0 %v1167
    %v1169 = vpop.f32.mrf.mxu0
    %v1170 = vadd.f32 %v950, %v1169
    %v1171 = vand.u32 %v233, 4294901760
    %v1172 = vsub.f32 %v233, %v1171
    %v1173 = vand.u32 %v1172, 4294901760
    %1174 = vmatmul.f32.gmra.mxu0 %v1173
    %v1175 = vpop.f32.mrf.mxu0
    %v1176 = vadd.f32 %v955, %v1175
    %v1177 = vand.u32 %v234, 4294901760
    %v1178 = vsub.f32 %v234, %v1177
    %v1179 = vand.u32 %v1178, 4294901760
    %1180 = vmatmul.f32.gmra.mxu0 %v1179
    %v1181 = vpop.f32.mrf.mxu0
    %v1182 = vadd.f32 %v960, %v1181
    %v1183 = vand.u32 %v235, 4294901760
    %v1184 = vsub.f32 %v235, %v1183
    %v1185 = vand.u32 %v1184, 4294901760
    %1186 = vmatmul.f32.gmra.mxu0 %v1185
    %v1187 = vpop.f32.mrf.mxu0
    %v1188 = vadd.f32 %v965, %v1187
    %v1189 = vand.u32 %v236, 4294901760
    %v1190 = vsub.f32 %v236, %v1189
    %v1191 = vand.u32 %v1190, 4294901760
    %1192 = vmatmul.f32.gmra.mxu0 %v1191
    %v1193 = vpop.f32.mrf.mxu0
    %v1194 = vadd.f32 %v970, %v1193
    %v1195 = vand.u32 %v237, 4294901760
    %v1196 = vsub.f32 %v237, %v1195
    %v1197 = vand.u32 %v1196, 4294901760
    %1198 = vmatmul.f32.gmra.mxu0 %v1197
    %v1199 = vpop.f32.mrf.mxu0
    %v1200 = vadd.f32 %v975, %v1199
    %1201 = vdwg.mxu0
    %v1202 = vand.u32 %v253, 4294901760
    %v1203 = vsub.f32 %v253, %v1202
    %v1204 = vand.u32 %v1203, 4294901760
    %1205 = vmatpush.msra.mxu0 %v1204
    %v1206 = vand.u32 %v252, 4294901760
    %v1207 = vsub.f32 %v252, %v1206
    %v1208 = vand.u32 %v1207, 4294901760
    %1209 = vmatpush.msra.mxu0 %v1208
    %v1210 = vand.u32 %v251, 4294901760
    %v1211 = vsub.f32 %v251, %v1210
    %v1212 = vand.u32 %v1211, 4294901760
    %1213 = vmatpush.msra.mxu0 %v1212
    %v1214 = vand.u32 %v250, 4294901760
    %v1215 = vsub.f32 %v250, %v1214
    %v1216 = vand.u32 %v1215, 4294901760
    %1217 = vmatpush.msra.mxu0 %v1216
    %v1218 = vand.u32 %v249, 4294901760
    %v1219 = vsub.f32 %v249, %v1218
    %v1220 = vand.u32 %v1219, 4294901760
    %1221 = vmatpush.msra.mxu0 %v1220
    %v1222 = vand.u32 %v248, 4294901760
    %v1223 = vsub.f32 %v248, %v1222
    %v1224 = vand.u32 %v1223, 4294901760
    %1225 = vmatpush.msra.mxu0 %v1224
    %v1226 = vand.u32 %v247, 4294901760
    %v1227 = vsub.f32 %v247, %v1226
    %v1228 = vand.u32 %v1227, 4294901760
    %1229 = vmatpush.msra.mxu0 %v1228
    %v1230 = vand.u32 %v246, 4294901760
    %v1231 = vsub.f32 %v246, %v1230
    %v1232 = vand.u32 %v1231, 4294901760
    %1233 = vmatpush.msra.mxu0 %v1232
    %v1234 = vand.u32 %v245, 4294901760
    %v1235 = vsub.f32 %v245, %v1234
    %v1236 = vand.u32 %v1235, 4294901760
    %1237 = vmatpush.msra.mxu0 %v1236
    %v1238 = vand.u32 %v244, 4294901760
    %v1239 = vsub.f32 %v244, %v1238
    %v1240 = vand.u32 %v1239, 4294901760
    %1241 = vmatpush.msra.mxu0 %v1240
    %v1242 = vand.u32 %v243, 4294901760
    %v1243 = vsub.f32 %v243, %v1242
    %v1244 = vand.u32 %v1243, 4294901760
    %1245 = vmatpush.msra.mxu0 %v1244
    %v1246 = vand.u32 %v242, 4294901760
    %v1247 = vsub.f32 %v242, %v1246
    %v1248 = vand.u32 %v1247, 4294901760
    %1249 = vmatpush.msra.mxu0 %v1248
    %v1250 = vand.u32 %v241, 4294901760
    %v1251 = vsub.f32 %v241, %v1250
    %v1252 = vand.u32 %v1251, 4294901760
    %1253 = vmatpush.msra.mxu0 %v1252
    %v1254 = vand.u32 %v240, 4294901760
    %v1255 = vsub.f32 %v240, %v1254
    %v1256 = vand.u32 %v1255, 4294901760
    %1257 = vmatpush.msra.mxu0 %v1256
    %v1258 = vand.u32 %v239, 4294901760
    %v1259 = vsub.f32 %v239, %v1258
    %v1260 = vand.u32 %v1259, 4294901760
    %1261 = vmatpush.msra.mxu0 %v1260
    %v1262 = vand.u32 %v238, 4294901760
    %v1263 = vsub.f32 %v238, %v1262
    %v1264 = vand.u32 %v1263, 4294901760
    %1265 = vmatpush.msra.mxu0 %v1264
    %v1266 = vand.u32 %v206, 4294901760
    %1267 = vmatmul.f32.gmra.mxu0 %v1266
    %v1268 = vpop.f32.mrf.mxu0
    %v1269 = vadd.f32 %v1014, %v1268
    %v1270 = vand.u32 %v207, 4294901760
    %1271 = vmatmul.f32.gmra.mxu0 %v1270
    %v1272 = vpop.f32.mrf.mxu0
    %v1273 = vadd.f32 %v1020, %v1272
    %v1274 = vand.u32 %v208, 4294901760
    %1275 = vmatmul.f32.gmra.mxu0 %v1274
    %v1276 = vpop.f32.mrf.mxu0
    %v1277 = vadd.f32 %v1026, %v1276
    %v1278 = vand.u32 %v209, 4294901760
    %1279 = vmatmul.f32.gmra.mxu0 %v1278
    %v1280 = vpop.f32.mrf.mxu0
    %v1281 = vadd.f32 %v1032, %v1280
    %v1282 = vand.u32 %v210, 4294901760
    %1283 = vmatmul.f32.gmra.mxu0 %v1282
    %v1284 = vpop.f32.mrf.mxu0
    %v1285 = vadd.f32 %v1038, %v1284
    %v1286 = vand.u32 %v211, 4294901760
    %1287 = vmatmul.f32.gmra.mxu0 %v1286
    %v1288 = vpop.f32.mrf.mxu0
    %v1289 = vadd.f32 %v1044, %v1288
    %v1290 = vand.u32 %v212, 4294901760
    %1291 = vmatmul.f32.gmra.mxu0 %v1290
    %v1292 = vpop.f32.mrf.mxu0
    %v1293 = vadd.f32 %v1050, %v1292
    %v1294 = vand.u32 %v213, 4294901760
    %1295 = vmatmul.f32.gmra.mxu0 %v1294
    %v1296 = vpop.f32.mrf.mxu0
    %v1297 = vadd.f32 %v1056, %v1296
    %v1298 = vand.u32 %v214, 4294901760
    %1299 = vmatmul.f32.gmra.mxu0 %v1298
    %v1300 = vpop.f32.mrf.mxu0
    %v1301 = vadd.f32 %v1062, %v1300
    %v1302 = vand.u32 %v215, 4294901760
    %1303 = vmatmul.f32.gmra.mxu0 %v1302
    %v1304 = vpop.f32.mrf.mxu0
    %v1305 = vadd.f32 %v1068, %v1304
    %v1306 = vand.u32 %v216, 4294901760
    %1307 = vmatmul.f32.gmra.mxu0 %v1306
    %v1308 = vpop.f32.mrf.mxu0
    %v1309 = vadd.f32 %v1074, %v1308
    %v1310 = vand.u32 %v217, 4294901760
    %1311 = vmatmul.f32.gmra.mxu0 %v1310
    %v1312 = vpop.f32.mrf.mxu0
    %v1313 = vadd.f32 %v1080, %v1312
    %v1314 = vand.u32 %v218, 4294901760
    %1315 = vmatmul.f32.gmra.mxu0 %v1314
    %v1316 = vpop.f32.mrf.mxu0
    %v1317 = vadd.f32 %v1086, %v1316
    %v1318 = vand.u32 %v219, 4294901760
    %1319 = vmatmul.f32.gmra.mxu0 %v1318
    %v1320 = vpop.f32.mrf.mxu0
    %v1321 = vadd.f32 %v1092, %v1320
    %v1322 = vand.u32 %v220, 4294901760
    %1323 = vmatmul.f32.gmra.mxu0 %v1322
    %v1324 = vpop.f32.mrf.mxu0
    %v1325 = vadd.f32 %v1098, %v1324
    %v1326 = vand.u32 %v221, 4294901760
    %1327 = vmatmul.f32.gmra.mxu0 %v1326
    %v1328 = vpop.f32.mrf.mxu0
    %v1329 = vadd.f32 %v1104, %v1328
    %v1330 = vand.u32 %v222, 4294901760
    %1331 = vmatmul.f32.gmra.mxu0 %v1330
    %v1332 = vpop.f32.mrf.mxu0
    %v1333 = vadd.f32 %v1110, %v1332
    %v1334 = vand.u32 %v223, 4294901760
    %1335 = vmatmul.f32.gmra.mxu0 %v1334
    %v1336 = vpop.f32.mrf.mxu0
    %v1337 = vadd.f32 %v1116, %v1336
    %v1338 = vand.u32 %v224, 4294901760
    %1339 = vmatmul.f32.gmra.mxu0 %v1338
    %v1340 = vpop.f32.mrf.mxu0
    %v1341 = vadd.f32 %v1122, %v1340
    %v1342 = vand.u32 %v225, 4294901760
    %1343 = vmatmul.f32.gmra.mxu0 %v1342
    %v1344 = vpop.f32.mrf.mxu0
    %v1345 = vadd.f32 %v1128, %v1344
    %v1346 = vand.u32 %v226, 4294901760
    %1347 = vmatmul.f32.gmra.mxu0 %v1346
    %v1348 = vpop.f32.mrf.mxu0
    %v1349 = vadd.f32 %v1134, %v1348
    %v1350 = vand.u32 %v227, 4294901760
    %1351 = vmatmul.f32.gmra.mxu0 %v1350
    %v1352 = vpop.f32.mrf.mxu0
    %v1353 = vadd.f32 %v1140, %v1352
    %v1354 = vand.u32 %v228, 4294901760
    %1355 = vmatmul.f32.gmra.mxu0 %v1354
    %v1356 = vpop.f32.mrf.mxu0
    %v1357 = vadd.f32 %v1146, %v1356
    %v1358 = vand.u32 %v229, 4294901760
    %1359 = vmatmul.f32.gmra.mxu0 %v1358
    %v1360 = vpop.f32.mrf.mxu0
    %v1361 = vadd.f32 %v1152, %v1360
    %v1362 = vand.u32 %v230, 4294901760
    %1363 = vmatmul.f32.gmra.mxu0 %v1362
    %v1364 = vpop.f32.mrf.mxu0
    %v1365 = vadd.f32 %v1158, %v1364
    %v1366 = vand.u32 %v231, 4294901760
    %1367 = vmatmul.f32.gmra.mxu0 %v1366
    %v1368 = vpop.f32.mrf.mxu0
    %v1369 = vadd.f32 %v1164, %v1368
    %v1370 = vand.u32 %v232, 4294901760
    %1371 = vmatmul.f32.gmra.mxu0 %v1370
    %v1372 = vpop.f32.mrf.mxu0
    %v1373 = vadd.f32 %v1170, %v1372
    %v1374 = vand.u32 %v233, 4294901760
    %1375 = vmatmul.f32.gmra.mxu0 %v1374
    %v1376 = vpop.f32.mrf.mxu0
    %v1377 = vadd.f32 %v1176, %v1376
    %v1378 = vand.u32 %v234, 4294901760
    %1379 = vmatmul.f32.gmra.mxu0 %v1378
    %v1380 = vpop.f32.mrf.mxu0
    %v1381 = vadd.f32 %v1182, %v1380
    %v1382 = vand.u32 %v235, 4294901760
    %1383 = vmatmul.f32.gmra.mxu0 %v1382
    %v1384 = vpop.f32.mrf.mxu0
    %v1385 = vadd.f32 %v1188, %v1384
    %v1386 = vand.u32 %v236, 4294901760
    %1387 = vmatmul.f32.gmra.mxu0 %v1386
    %v1388 = vpop.f32.mrf.mxu0
    %v1389 = vadd.f32 %v1194, %v1388
    %v1390 = vand.u32 %v237, 4294901760
    %1391 = vmatmul.f32.gmra.mxu0 %v1390
    %v1392 = vpop.f32.mrf.mxu0
    %v1393 = vadd.f32 %v1200, %v1392
    %1394 = vdwg.mxu0
    %v1395 = vand.u32 %v253, 4294901760
    %1396 = vmatpush.msra.mxu0 %v1395
    %v1397 = vand.u32 %v252, 4294901760
    %1398 = vmatpush.msra.mxu0 %v1397
    %v1399 = vand.u32 %v251, 4294901760
    %1400 = vmatpush.msra.mxu0 %v1399
    %v1401 = vand.u32 %v250, 4294901760
    %1402 = vmatpush.msra.mxu0 %v1401
    %v1403 = vand.u32 %v249, 4294901760
    %1404 = vmatpush.msra.mxu0 %v1403
    %v1405 = vand.u32 %v248, 4294901760
    %1406 = vmatpush.msra.mxu0 %v1405
    %v1407 = vand.u32 %v247, 4294901760
    %1408 = vmatpush.msra.mxu0 %v1407
    %v1409 = vand.u32 %v246, 4294901760
    %1410 = vmatpush.msra.mxu0 %v1409
    %v1411 = vand.u32 %v245, 4294901760
    %1412 = vmatpush.msra.mxu0 %v1411
    %v1413 = vand.u32 %v244, 4294901760
    %1414 = vmatpush.msra.mxu0 %v1413
    %v1415 = vand.u32 %v243, 4294901760
    %1416 = vmatpush.msra.mxu0 %v1415
    %v1417 = vand.u32 %v242, 4294901760
    %1418 = vmatpush.msra.mxu0 %v1417
    %v1419 = vand.u32 %v241, 4294901760
    %1420 = vmatpush.msra.mxu0 %v1419
    %v1421 = vand.u32 %v240, 4294901760
    %1422 = vmatpush.msra.mxu0 %v1421
    %v1423 = vand.u32 %v239, 4294901760
    %1424 = vmatpush.msra.mxu0 %v1423
    %v1425 = vand.u32 %v238, 4294901760
    %1426 = vmatpush.msra.mxu0 %v1425
    %v1427 = vand.u32 %v206, 4294901760
    %1428 = vmatmul.f32.gmra.mxu0 %v1427
    %v1429 = vpop.f32.mrf.mxu0
    %v1430 = vadd.f32 %v1269, %v1429
    %v1431 = vand.u32 %v207, 4294901760
    %1432 = vmatmul.f32.gmra.mxu0 %v1431
    %v1433 = vpop.f32.mrf.mxu0
    %v1434 = vadd.f32 %v1273, %v1433
    %v1435 = vand.u32 %v208, 4294901760
    %1436 = vmatmul.f32.gmra.mxu0 %v1435
    %v1437 = vpop.f32.mrf.mxu0
    %v1438 = vadd.f32 %v1277, %v1437
    %v1439 = vand.u32 %v209, 4294901760
    %1440 = vmatmul.f32.gmra.mxu0 %v1439
    %v1441 = vpop.f32.mrf.mxu0
    %v1442 = vadd.f32 %v1281, %v1441
    %v1443 = vand.u32 %v210, 4294901760
    %1444 = vmatmul.f32.gmra.mxu0 %v1443
    %v1445 = vpop.f32.mrf.mxu0
    %v1446 = vadd.f32 %v1285, %v1445
    %v1447 = vand.u32 %v211, 4294901760
    %1448 = vmatmul.f32.gmra.mxu0 %v1447
    %v1449 = vpop.f32.mrf.mxu0
    %v1450 = vadd.f32 %v1289, %v1449
    %v1451 = vand.u32 %v212, 4294901760
    %1452 = vmatmul.f32.gmra.mxu0 %v1451
    %v1453 = vpop.f32.mrf.mxu0
    %v1454 = vadd.f32 %v1293, %v1453
    %v1455 = vand.u32 %v213, 4294901760
    %1456 = vmatmul.f32.gmra.mxu0 %v1455
    %v1457 = vpop.f32.mrf.mxu0
    %v1458 = vadd.f32 %v1297, %v1457
    %v1459 = vand.u32 %v214, 4294901760
    %1460 = vmatmul.f32.gmra.mxu0 %v1459
    %v1461 = vpop.f32.mrf.mxu0
    %v1462 = vadd.f32 %v1301, %v1461
    %v1463 = vand.u32 %v215, 4294901760
    %1464 = vmatmul.f32.gmra.mxu0 %v1463
    %v1465 = vpop.f32.mrf.mxu0
    %v1466 = vadd.f32 %v1305, %v1465
    %v1467 = vand.u32 %v216, 4294901760
    %1468 = vmatmul.f32.gmra.mxu0 %v1467
    %v1469 = vpop.f32.mrf.mxu0
    %v1470 = vadd.f32 %v1309, %v1469
    %v1471 = vand.u32 %v217, 4294901760
    %1472 = vmatmul.f32.gmra.mxu0 %v1471
    %v1473 = vpop.f32.mrf.mxu0
    %v1474 = vadd.f32 %v1313, %v1473
    %v1475 = vand.u32 %v218, 4294901760
    %1476 = vmatmul.f32.gmra.mxu0 %v1475
    %v1477 = vpop.f32.mrf.mxu0
    %v1478 = vadd.f32 %v1317, %v1477
    %v1479 = vand.u32 %v219, 4294901760
    %1480 = vmatmul.f32.gmra.mxu0 %v1479
    %v1481 = vpop.f32.mrf.mxu0
    %v1482 = vadd.f32 %v1321, %v1481
    %v1483 = vand.u32 %v220, 4294901760
    %1484 = vmatmul.f32.gmra.mxu0 %v1483
    %v1485 = vpop.f32.mrf.mxu0
    %v1486 = vadd.f32 %v1325, %v1485
    %v1487 = vand.u32 %v221, 4294901760
    %1488 = vmatmul.f32.gmra.mxu0 %v1487
    %v1489 = vpop.f32.mrf.mxu0
    %v1490 = vadd.f32 %v1329, %v1489
    %v1491 = vand.u32 %v222, 4294901760
    %1492 = vmatmul.f32.gmra.mxu0 %v1491
    %v1493 = vpop.f32.mrf.mxu0
    %v1494 = vadd.f32 %v1333, %v1493
    %v1495 = vand.u32 %v223, 4294901760
    %1496 = vmatmul.f32.gmra.mxu0 %v1495
    %v1497 = vpop.f32.mrf.mxu0
    %v1498 = vadd.f32 %v1337, %v1497
    %v1499 = vand.u32 %v224, 4294901760
    %1500 = vmatmul.f32.gmra.mxu0 %v1499
    %v1501 = vpop.f32.mrf.mxu0
    %v1502 = vadd.f32 %v1341, %v1501
    %v1503 = vand.u32 %v225, 4294901760
    %1504 = vmatmul.f32.gmra.mxu0 %v1503
    %v1505 = vpop.f32.mrf.mxu0
    %v1506 = vadd.f32 %v1345, %v1505
    %v1507 = vand.u32 %v226, 4294901760
    %1508 = vmatmul.f32.gmra.mxu0 %v1507
    %v1509 = vpop.f32.mrf.mxu0
    %v1510 = vadd.f32 %v1349, %v1509
    %v1511 = vand.u32 %v227, 4294901760
    %1512 = vmatmul.f32.gmra.mxu0 %v1511
    %v1513 = vpop.f32.mrf.mxu0
    %v1514 = vadd.f32 %v1353, %v1513
    %v1515 = vand.u32 %v228, 4294901760
    %1516 = vmatmul.f32.gmra.mxu0 %v1515
    %v1517 = vpop.f32.mrf.mxu0
    %v1518 = vadd.f32 %v1357, %v1517
    %v1519 = vand.u32 %v229, 4294901760
    %1520 = vmatmul.f32.gmra.mxu0 %v1519
    %v1521 = vpop.f32.mrf.mxu0
    %v1522 = vadd.f32 %v1361, %v1521
    %v1523 = vand.u32 %v230, 4294901760
    %1524 = vmatmul.f32.gmra.mxu0 %v1523
    %v1525 = vpop.f32.mrf.mxu0
    %v1526 = vadd.f32 %v1365, %v1525
    %v1527 = vand.u32 %v231, 4294901760
    %1528 = vmatmul.f32.gmra.mxu0 %v1527
    %v1529 = vpop.f32.mrf.mxu0
    %v1530 = vadd.f32 %v1369, %v1529
    %v1531 = vand.u32 %v232, 4294901760
    %1532 = vmatmul.f32.gmra.mxu0 %v1531
    %v1533 = vpop.f32.mrf.mxu0
    %v1534 = vadd.f32 %v1373, %v1533
    %v1535 = vand.u32 %v233, 4294901760
    %1536 = vmatmul.f32.gmra.mxu0 %v1535
    %v1537 = vpop.f32.mrf.mxu0
    %v1538 = vadd.f32 %v1377, %v1537
    %v1539 = vand.u32 %v234, 4294901760
    %1540 = vmatmul.f32.gmra.mxu0 %v1539
    %v1541 = vpop.f32.mrf.mxu0
    %v1542 = vadd.f32 %v1381, %v1541
    %v1543 = vand.u32 %v235, 4294901760
    %1544 = vmatmul.f32.gmra.mxu0 %v1543
    %v1545 = vpop.f32.mrf.mxu0
    %v1546 = vadd.f32 %v1385, %v1545
    %v1547 = vand.u32 %v236, 4294901760
    %1548 = vmatmul.f32.gmra.mxu0 %v1547
    %v1549 = vpop.f32.mrf.mxu0
    %v1550 = vadd.f32 %v1389, %v1549
    %v1551 = vand.u32 %v237, 4294901760
    %1552 = vmatmul.f32.gmra.mxu0 %v1551
    %v1553 = vpop.f32.mrf.mxu0
    %v1554 = vadd.f32 %v1393, %v1553
    %1555 = vdwg.mxu0
    %1556 = vst [vmem:[#allocation2] sm:$0xff] %v1430
    %1557 = vst [vmem:[#allocation2 + $0x8] sm:$0xff] %v1434
    %1558 = vst [vmem:[#allocation2 + $0x10] sm:$0xff] %v1438
    %1559 = vst [vmem:[#allocation2 + $0x18] sm:$0xff] %v1442
    %1560 = vst [vmem:[#allocation2 + $0x20] sm:$0xff] %v1446
    %1561 = vst [vmem:[#allocation2 + $0x28] sm:$0xff] %v1450
    %1562 = vst [vmem:[#allocation2 + $0x30] sm:$0xff] %v1454
    %1563 = vst [vmem:[#allocation2 + $0x38] sm:$0xff] %v1458
    %1564 = vst [vmem:[#allocation2 + $0x40] sm:$0xff] %v1462
    %1565 = vst [vmem:[#allocation2 + $0x48] sm:$0xff] %v1466
    %1566 = vst [vmem:[#allocation2 + $0x50] sm:$0xff] %v1470
    %1567 = vst [vmem:[#allocation2 + $0x58] sm:$0xff] %v1474
    %1568 = vst [vmem:[#allocation2 + $0x60] sm:$0xff] %v1478
    %1569 = vst [vmem:[#allocation2 + $0x68] sm:$0xff] %v1482
    %1570 = vst [vmem:[#allocation2 + $0x70] sm:$0xff] %v1486
    %1571 = vst [vmem:[#allocation2 + $0x78] sm:$0xff] %v1490
    %1572 = vst [vmem:[#allocation2 + $0x80] sm:$0xff] %v1494
    %1573 = vst [vmem:[#allocation2 + $0x88] sm:$0xff] %v1498
    %1574 = vst [vmem:[#allocation2 + $0x90] sm:$0xff] %v1502
    %1575 = vst [vmem:[#allocation2 + $0x98] sm:$0xff] %v1506
    %1576 = vst [vmem:[#allocation2 + $0xa0] sm:$0xff] %v1510
    %1577 = vst [vmem:[#allocation2 + $0xa8] sm:$0xff] %v1514
    %1578 = vst [vmem:[#allocation2 + $0xb0] sm:$0xff] %v1518
    %1579 = vst [vmem:[#allocation2 + $0xb8] sm:$0xff] %v1522
    %1580 = vst [vmem:[#allocation2 + $0xc0] sm:$0xff] %v1526
    %1581 = vst [vmem:[#allocation2 + $0xc8] sm:$0xff] %v1530
    %1582 = vst [vmem:[#allocation2 + $0xd0] sm:$0xff] %v1534
    %1583 = vst [vmem:[#allocation2 + $0xd8] sm:$0xff] %v1538
    %1584 = vst [vmem:[#allocation2 + $0xe0] sm:$0xff] %v1542
    %1585 = vst [vmem:[#allocation2 + $0xe8] sm:$0xff] %v1546
    %1586 = vst [vmem:[#allocation2 + $0xf0] sm:$0xff] %v1550
    %1587 = vst [vmem:[#allocation2 + $0xf8] sm:$0xff] %v1554
    // Predicated region
    $region10: #{tpu_custom_call.1} parent=1 // pred_check
      _
    $region11: #{tpu_custom_call.1} parent=1 // pred_check_branch
      %1589 = sbr.rel (0) target = $region13
    $region12: #{tpu_custom_call.1} parent=1 // pred_region
      %1591 = vsyncadd [#allocation3], 0
      %s1592 = sshll.u32 [#allocation2], 4
      %s1593 = int_to_ptr.vmem [resolvable:$true] %s1592
      %s1594 = sshll.u32 %s2, 4
      %s1595 = int_to_ptr.hbm [resolvable:$true] %s1594
      %1600 = dma.vmem_to_hbm [thread:$0]  %s1593, 4096, %s1595, [#allocation3], 128, 128, 8
    $region13: #{tpu_custom_call.1} parent=1 // pred_fallthru
      _
    // Predicated region
    $region14: #{tpu_custom_call.1} parent=1 // pred_check
      _
    $region15: #{tpu_custom_call.1} parent=1 // pred_check_branch
      %1602 = sbr.rel (0) target = $region17
    $region16: #{tpu_custom_call.1} parent=1 // pred_region
      %1604 = dma.done [#allocation3], 4096
    $region17: #{tpu_custom_call.1} parent=1 // pred_fallthru
      _
    %1605 = vsyncpa [#allocation3], 1

</llo_original>
